<compile_context>
chip_gen: v7x
topology: tpu7x:2x2x1
jax: 0.10.0
libtpu: 0.0.40
codegen_flags: <defaults>
</compile_context>

<pallas_src>
import math

import jax
import jax.numpy as jnp
from jax.experimental import pallas as pl
from jax.experimental.pallas import tpu as pltpu


CFG = dict(vocab=50, hidden=32, heads=2, head_dim=16, inter=64,
           layers=2, max_pos=16, type_vocab=2, num_labels=6)

LANE = 128  # packed-blob lane width; also the lane-dense output width


def _round_up(x, m):
    return (x + m - 1) // m * m


# ---------------------------------------------------------------------------
# Packed parameter layouts (shared by init_params and the kernel).
# ---------------------------------------------------------------------------
def _w_layout(cfg):
    """bf16 weight blob: rows of a (R, 128) matrix, offsets 16-aligned."""
    H, inter, L = cfg["hidden"], cfg["inter"], cfg["layers"]
    per_layer = H + H + H + inter          # wqkv | wo | w1 | w2 rows
    off = {}
    for l in range(L):
        base = l * per_layer
        off[("wqkv", l)] = base            # (H, 3H)
        off[("wo", l)] = base + H          # (H, H)
        off[("w1", l)] = base + 2 * H      # (H, inter)
        off[("w2", l)] = base + 3 * H      # (inter, H)
    off["pool_w"] = L * per_layer          # (H, H)
    off["cls_w"] = L * per_layer + H       # (H, num_labels) zero-padded to 128
    rows = _round_up(L * per_layer + 2 * H, 16)   # bf16 sublane tile = 16
    return off, rows


def _f_layout(cfg):
    """f32 blob: embedding tables + every bias / LayerNorm vector, one row each."""
    H, L = cfg["hidden"], cfg["layers"]
    vp = _round_up(cfg["vocab"], 8)        # padded vocab rows (one-hot width)
    off = {"word": 0}
    r = vp
    off["pos"] = r;      r += cfg["max_pos"]
    off["type"] = r;     r += cfg["type_vocab"]
    off["emb_ln_g"] = r; r += 1
    off["emb_ln_b"] = r; r += 1
    names = ("bqkv", "bo", "ln1_g", "ln1_b", "b1", "b2", "ln2_g", "ln2_b")
    for l in range(L):
        for n in names:
            off[(n, l)] = r
            r += 1
    off["pool_b"] = r; r += 1
    off["cls_b"] = r;  r += 1
    rows = _round_up(r, 8)
    return off, rows, vp


# ---------------------------------------------------------------------------
# Single fused kernel: embeddings -> emb-LN -> [attn + LN, FFN + LN] x L
#                      -> pooler(tanh) -> classifier (lane-dense store)
# ---------------------------------------------------------------------------
def _make_fused_kernel(B, S, cfg):
    H, nh, dh = cfg["hidden"], cfg["heads"], cfg["head_dim"]
    inter, L = cfg["inter"], cfg["layers"]
    BS = B * S
    woff, _ = _w_layout(cfg)
    foff, _, VP = _f_layout(cfg)

    def _ln(x, g, b):
        # LayerNorm over hidden dim, eps = 1e-12 (BERT), f32 math.
        mu = jnp.mean(x, axis=-1, keepdims=True)
        xc = x - mu
        var = jnp.mean(xc * xc, axis=-1, keepdims=True)
        return xc * jax.lax.rsqrt(var + 1e-12) * g + b

    def _dot(a, w):
        # bf16 MXU operands, f32 accumulation.
        return jnp.dot(a.astype(jnp.bfloat16), w,
                       preferred_element_type=jnp.float32)

    def kernel(ids_ref, mask_ref, f_ref, w_ref, o_ref):
        f32 = jnp.float32

        def fvec(name, width):
            r = foff[name]
            return f_ref[r:r + 1, 0:width]          # (1, width) f32 row

        # ---- embeddings built in-kernel (one-hot @ table on the MXU) ------
        ids = ids_ref[...]                                          # (BS, 1)
        onehot = (jax.lax.broadcasted_iota(jnp.int32, (BS, VP), 1)
                  == ids).astype(f32)                               # (BS, VP)
        word = jnp.dot(onehot, f_ref[0:VP, 0:H],
                       preferred_element_type=f32)                  # (BS, H)
        pos = f_ref[foff["pos"]:foff["pos"] + S, 0:H]               # (S, H)
        typ = f_ref[foff["type"]:foff["type"] + 1, 0:H]             # token_type 0
        emb = word.reshape(B, S, H) + (pos + typ)[None]             # (B, S, H)
        x = _ln(emb.reshape(BS, H), fvec("emb_ln_g", H), fvec("emb_ln_b", H))

        # ---- additive key mask, broadcast hoisted once ---------------------
        am = mask_ref[...].astype(f32)                              # (B, S)
        neg = (1.0 - am) * -10000.0
        mask_bss = jnp.broadcast_to(neg[:, None, :], (B, S, S))

        # ---- encoder layers (unrolled, static ref slicing of the blobs) ----
        for l in range(L):
            # fused QKV projection; 1/sqrt(dh) folded into Wq at pack time
            # (valid because bqkv == 0).
            wq_r = woff[("wqkv", l)]
            qkv = _dot(x, w_ref[wq_r:wq_r + H, 0:3 * H]) \
                + fvec(("bqkv", l), 3 * H)                          # (BS, 3H)
            qkv_bf = qkv.astype(jnp.bfloat16)                       # single cast

            ctx_proj = jnp.zeros((BS, H), f32)
            for h in range(nh):
                q = qkv_bf[:, h * dh:(h + 1) * dh].reshape(B, S, dh)
                k = qkv_bf[:, H + h * dh:H + (h + 1) * dh].reshape(B, S, dh)
                v = qkv_bf[:, 2 * H + h * dh:2 * H + (h + 1) * dh].reshape(B, S, dh)

                s = jnp.einsum('bqd,bkd->bqk', q, k,
                               preferred_element_type=f32) + mask_bss
                s = s - jnp.max(s, axis=-1, keepdims=True)
                p = jnp.exp(s)
                p = p * pl.reciprocal(jnp.sum(p, axis=-1, keepdims=True),
                                      approx=True)
                ctx = jnp.einsum('bqk,bkd->bqd', p.astype(jnp.bfloat16), v,
                                 preferred_element_type=f32).reshape(BS, dh)
                # per-head Wo row block (16-aligned sublane slice): replaces
                # the lane-axis concat of head contexts.
                wo_r = woff[("wo", l)] + h * dh
                ctx_proj = ctx_proj + _dot(ctx, w_ref[wo_r:wo_r + dh, 0:H])

            x = _ln(x + ctx_proj + fvec(("bo", l), H),
                    fvec(("ln1_g", l), H), fvec(("ln1_b", l), H))

            # ---- FFN + residual + LayerNorm --------------------------------
            w1_r = woff[("w1", l)]
            w2_r = woff[("w2", l)]
            hmid = _dot(x, w_ref[w1_r:w1_r + H, 0:inter]) + fvec(("b1", l), inter)
            # TODO(synk): BERT uses exact erf GELU; tanh approximation kept for
            # guaranteed Mosaic lowering (~1e-3 max abs activation diff).
            hmid = 0.5 * hmid * (1.0 + jnp.tanh(
                0.7978845608028654 * (hmid + 0.044715 * hmid * hmid * hmid)))
            ffn = _dot(hmid, w_ref[w2_r:w2_r + inter, 0:H]) + fvec(("b2", l), H)
            x = _ln(x + ffn, fvec(("ln2_g", l), H), fvec(("ln2_b", l), H))

        # ---- pooler ([CLS] -> Linear -> tanh) + classifier ------------------
        cls_tok = x.reshape(B, S, H)[:, 0, :]                       # (B, H)
        wp_r = woff["pool_w"]
        pooled = jnp.tanh(_dot(cls_tok, w_ref[wp_r:wp_r + H, 0:H])
                          + fvec("pool_b", H))
        wc_r = woff["cls_w"]
        logits = _dot(pooled, w_ref[wc_r:wc_r + H, 0:LANE]) + fvec("cls_b", LANE)
        o_ref[...] = logits.astype(o_ref.dtype)                     # (B, 128)

    return kernel


# ---------------------------------------------------------------------------
# Parameter init: deterministic synthetic weights, packed into two blobs.
# ---------------------------------------------------------------------------
def init_params(key, cfg):
    H, inter, L = cfg["hidden"], cfg["inter"], cfg["layers"]
    dh, NL = cfg["head_dim"], cfg["num_labels"]
    woff, wrows = _w_layout(cfg)
    foff, frows, _ = _f_layout(cfg)

    def nrm(k, shape):
        return 0.02 * jax.random.normal(k, shape, dtype=jnp.float32)

    keys = jax.random.split(key, 6 * L + 6)
    ki = iter(keys)

    wblob = jnp.zeros((wrows, LANE), jnp.float32)
    fblob = jnp.zeros((frows, LANE), jnp.float32)

    def put_w(name, mat):
        nonlocal wblob
        r, c = mat.shape
        wblob = wblob.at[woff[name]:woff[name] + r, 0:c].set(mat)

    def put_f(name, vec):
        nonlocal fblob
        vec = vec.reshape(1, -1)
        fblob = fblob.at[foff[name]:foff[name] + 1, 0:vec.shape[1]].set(vec)

    # embedding tables
    fblob = fblob.at[foff["word"]:foff["word"] + cfg["vocab"], 0:H].set(
        nrm(next(ki), (cfg["vocab"], H)))
    fblob = fblob.at[foff["pos"]:foff["pos"] + cfg["max_pos"], 0:H].set(
        nrm(next(ki), (cfg["max_pos"], H)))
    fblob = fblob.at[foff["type"]:foff["type"] + cfg["type_vocab"], 0:H].set(
        nrm(next(ki), (cfg["type_vocab"], H)))
    put_f("emb_ln_g", jnp.ones((H,), jnp.float32))
    put_f("emb_ln_b", jnp.zeros((H,), jnp.float32))

    scale = 1.0 / math.sqrt(dh)
    for l in range(L):
        wq = nrm(next(ki), (H, H)) * scale        # fold 1/sqrt(dh) into Wq
        wk = nrm(next(ki), (H, H))
        wv = nrm(next(ki), (H, H))
        put_w(("wqkv", l), jnp.concatenate([wq, wk, wv], axis=1))   # (H, 3H)
        put_w(("wo", l), nrm(next(ki), (H, H)))
        put_w(("w1", l), nrm(next(ki), (H, inter)))
        put_w(("w2", l), nrm(next(ki), (inter, H)))
        put_f(("bqkv", l), jnp.zeros((3 * H,), jnp.float32))
        put_f(("bo", l), jnp.zeros((H,), jnp.float32))
        put_f(("ln1_g", l), jnp.ones((H,), jnp.float32))
        put_f(("ln1_b", l), jnp.zeros((H,), jnp.float32))
        put_f(("b1", l), jnp.zeros((inter,), jnp.float32))
        put_f(("b2", l), jnp.zeros((H,), jnp.float32))
        put_f(("ln2_g", l), jnp.ones((H,), jnp.float32))
        put_f(("ln2_b", l), jnp.zeros((H,), jnp.float32))

    put_w("pool_w", nrm(next(ki), (H, H)))
    put_w("cls_w", nrm(next(ki), (H, NL)))        # zero-padded to 128 lanes
    put_f("pool_b", jnp.zeros((H,), jnp.float32))
    put_f("cls_b", jnp.zeros((LANE,), jnp.float32))

    return dict(w_blob=wblob.astype(jnp.bfloat16), f32_blob=fblob)


# ---------------------------------------------------------------------------
# Forward pass: ONE fused pallas_call (everything in VMEM), tiny glue slice.
# ---------------------------------------------------------------------------
def emotion_classifier_forward(params, input_ids, attention_mask, cfg=CFG):
    B, S = input_ids.shape
    H, inter, L = cfg["hidden"], cfg["inter"], cfg["layers"]
    nh, dh, NL = cfg["heads"], cfg["head_dim"], cfg["num_labels"]
    BS = B * S
    _, _, vp = _f_layout(cfg)

    kernel = _make_fused_kernel(B, S, cfg)

    # rough cost hint so XLA schedules the surrounding glue around the call
    flops = (2 * BS * vp * H
             + L * (2 * BS * H * 3 * H
                    + nh * (4 * B * S * S * dh + 2 * BS * dh * H)
                    + 4 * BS * H * inter)
             + 2 * B * H * H + 2 * B * H * LANE)
    trans = L * nh * B * S * S + L * BS * inter + B * H + 8 * L * BS
    bytes_acc = (params["w_blob"].size * 2 + params["f32_blob"].size * 4
                 + 2 * B * S * 4 + B * LANE * 4)

    vmem_spec = pl.BlockSpec(memory_space=pltpu.MemorySpace.VMEM)
    out = pl.pallas_call(
        kernel,
        out_shape=jax.ShapeDtypeStruct((B, LANE), jnp.float32),
        in_specs=[vmem_spec, vmem_spec, vmem_spec, vmem_spec],
        out_specs=vmem_spec,
        cost_estimate=pl.CostEstimate(flops=flops, transcendentals=trans,
                                      bytes_accessed=bytes_acc),
    )(input_ids.astype(jnp.int32).reshape(BS, 1),
      attention_mask.astype(jnp.int32),
      params["f32_blob"], params["w_blob"])

    return out[:, :NL]                      # lane-dense store, slice in glue


# ---------------------------------------------------------------------------
if __name__ == "__main__":
    key = jax.random.PRNGKey(0)
    k_param, k_ids = jax.random.split(key)

    B, S = 2, 8
    params = init_params(k_param, CFG)
    input_ids = jax.random.randint(k_ids, (B, S), 0, CFG["vocab"], dtype=jnp.int32)
    attention_mask = jnp.array(
        [[1, 1, 1, 1, 1, 1, 1, 1],
         [1, 1, 1, 1, 1, 0, 0, 0]], dtype=jnp.int32)

    fwd = jax.jit(emotion_classifier_forward)
    logits = fwd(params, input_ids, attention_mask)
    jax.block_until_ready(logits)
    assert logits.shape == (B, CFG["num_labels"])
    print("KERNEL_OK")
</pallas_src>

<mosaic_0001>
module attributes {stable_mosaic.version = 11 : i64} {
  func.func @kernel(%arg0: memref<16x1xi32, #tpu.memory_space<vmem>>, %arg1: memref<2x8xi32, #tpu.memory_space<vmem>>, %arg2: memref<96x128xf32, #tpu.memory_space<vmem>>, %arg3: memref<384x128xbf16, #tpu.memory_space<vmem>>, %arg4: memref<2x128xf32, #tpu.memory_space<vmem>>) attributes {dimension_semantics = [], scalar_prefetch = 0 : i64, scratch_operands = 0 : i64, tpu.core_type = #tpu.core_type<tc>} {
    %c0 = arith.constant 0 : index
    %c0_0 = arith.constant 0 : index
    %0 = vector.load %arg0[%c0, %c0_0] : memref<16x1xi32, #tpu.memory_space<vmem>>, vector<16x1xi32>
    %1 = tpu.iota {dimensions = array<i32: 1>} : vector<16x56xi32>
    %2 = vector.broadcast %0 : vector<16x1xi32> to vector<16x56xi32>
    %3 = arith.cmpi eq, %1, %2 : vector<16x56xi32>
    %4 = arith.extui %3 : vector<16x56xi1> to vector<16x56xi32>
    %5 = arith.sitofp %4 : vector<16x56xi32> to vector<16x56xf32>
    %c0_1 = arith.constant 0 : index
    %c0_2 = arith.constant 0 : index
    %6 = vector.load %arg2[%c0_1, %c0_2] : memref<96x128xf32, #tpu.memory_space<vmem>>, vector<56x32xf32>
    %cst = arith.constant dense<0.000000e+00> : vector<16x32xf32>
    %7 = tpu.matmul %5, %6, %cst {dimension_numbers = #tpu.dot_dimension_numbers<[1], [0], [0], [1], [0, 0, 1, 1], [], []>} : vector<16x56xf32>, vector<56x32xf32>, vector<16x32xf32> -> vector<16x32xf32>
    %c56 = arith.constant 56 : index
    %c0_3 = arith.constant 0 : index
    %8 = vector.load %arg2[%c56, %c0_3] : memref<96x128xf32, #tpu.memory_space<vmem>>, vector<8x32xf32>
    %c72 = arith.constant 72 : index
    %c0_4 = arith.constant 0 : index
    %9 = vector.load %arg2[%c72, %c0_4] : memref<96x128xf32, #tpu.memory_space<vmem>>, vector<1x32xf32>
    %10 = vector.shape_cast %7 : vector<16x32xf32> to vector<2x8x32xf32>
    %11 = vector.broadcast %9 : vector<1x32xf32> to vector<8x32xf32>
    %12 = arith.addf %8, %11 : vector<8x32xf32>
    %13 = vector.shape_cast %12 : vector<8x32xf32> to vector<1x8x32xf32>
    %14 = vector.broadcast %13 : vector<1x8x32xf32> to vector<2x8x32xf32>
    %15 = arith.addf %10, %14 : vector<2x8x32xf32>
    %16 = vector.shape_cast %15 : vector<2x8x32xf32> to vector<16x32xf32>
    %c74 = arith.constant 74 : index
    %c0_5 = arith.constant 0 : index
    %17 = vector.load %arg2[%c74, %c0_5] : memref<96x128xf32, #tpu.memory_space<vmem>>, vector<1x32xf32>
    %c75 = arith.constant 75 : index
    %c0_6 = arith.constant 0 : index
    %18 = vector.load %arg2[%c75, %c0_6] : memref<96x128xf32, #tpu.memory_space<vmem>>, vector<1x32xf32>
    %cst_7 = arith.constant dense<0.000000e+00> : vector<16xf32>
    %19 = vector.multi_reduction <add>, %16, %cst_7 [1] : vector<16x32xf32> to vector<16xf32>
    %20 = vector.shape_cast %19 : vector<16xf32> to vector<16x1xf32>
    %cst_8 = arith.constant 3.200000e+01 : f32
    %21 = vector.broadcast %cst_8 : f32 to vector<16x1xf32>
    %22 = arith.divf %20, %21 : vector<16x1xf32>
    %23 = vector.broadcast %22 : vector<16x1xf32> to vector<16x32xf32>
    %24 = arith.subf %16, %23 : vector<16x32xf32>
    %25 = arith.mulf %24, %24 : vector<16x32xf32>
    %cst_9 = arith.constant dense<0.000000e+00> : vector<16xf32>
    %26 = vector.multi_reduction <add>, %25, %cst_9 [1] : vector<16x32xf32> to vector<16xf32>
    %27 = vector.shape_cast %26 : vector<16xf32> to vector<16x1xf32>
    %cst_10 = arith.constant 3.200000e+01 : f32
    %28 = vector.broadcast %cst_10 : f32 to vector<16x1xf32>
    %29 = arith.divf %27, %28 : vector<16x1xf32>
    %cst_11 = arith.constant 9.99999996E-13 : f32
    %30 = vector.broadcast %cst_11 : f32 to vector<16x1xf32>
    %31 = arith.addf %29, %30 : vector<16x1xf32>
    %32 = math.rsqrt %31 : vector<16x1xf32>
    %33 = vector.broadcast %32 : vector<16x1xf32> to vector<16x32xf32>
    %34 = arith.mulf %24, %33 : vector<16x32xf32>
    %35 = vector.broadcast %17 : vector<1x32xf32> to vector<16x32xf32>
    %36 = arith.mulf %34, %35 : vector<16x32xf32>
    %37 = vector.broadcast %18 : vector<1x32xf32> to vector<16x32xf32>
    %38 = arith.addf %36, %37 : vector<16x32xf32>
    %c0_12 = arith.constant 0 : index
    %c0_13 = arith.constant 0 : index
    %39 = vector.load %arg1[%c0_12, %c0_13] : memref<2x8xi32, #tpu.memory_space<vmem>>, vector<2x8xi32>
    %40 = arith.sitofp %39 : vector<2x8xi32> to vector<2x8xf32>
    %cst_14 = arith.constant 1.000000e+00 : f32
    %41 = vector.broadcast %cst_14 : f32 to vector<2x8xf32>
    %42 = arith.subf %41, %40 : vector<2x8xf32>
    %cst_15 = arith.constant -1.000000e+04 : f32
    %43 = vector.broadcast %cst_15 : f32 to vector<2x8xf32>
    %44 = arith.mulf %42, %43 : vector<2x8xf32>
    %45 = vector.shape_cast %44 : vector<2x8xf32> to vector<2x1x8xf32>
    %46 = vector.shape_cast %45 : vector<2x1x8xf32> to vector<2x1x8xf32>
    %47 = vector.broadcast %46 : vector<2x1x8xf32> to vector<2x8x8xf32>
    %c0_16 = arith.constant 0 : index
    %c0_17 = arith.constant 0 : index
    %48 = vector.load %arg3[%c0_16, %c0_17] : memref<384x128xbf16, #tpu.memory_space<vmem>>, vector<32x96xbf16>
    %49 = arith.truncf %38 : vector<16x32xf32> to vector<16x32xbf16>
    %cst_18 = arith.constant dense<0.000000e+00> : vector<16x96xf32>
    %50 = tpu.matmul %49, %48, %cst_18 {dimension_numbers = #tpu.dot_dimension_numbers<[1], [0], [0], [1], [0, 0, 1, 1], [], []>} : vector<16x32xbf16>, vector<32x96xbf16>, vector<16x96xf32> -> vector<16x96xf32>
    %c76 = arith.constant 76 : index
    %c0_19 = arith.constant 0 : index
    %51 = vector.load %arg2[%c76, %c0_19] : memref<96x128xf32, #tpu.memory_space<vmem>>, vector<1x96xf32>
    %52 = vector.broadcast %51 : vector<1x96xf32> to vector<16x96xf32>
    %53 = arith.addf %50, %52 : vector<16x96xf32>
    %54 = arith.truncf %53 : vector<16x96xf32> to vector<16x96xbf16>
    %cst_20 = arith.constant 0.000000e+00 : f32
    %55 = vector.broadcast %cst_20 : f32 to vector<16x32xf32>
    %56 = vector.extract_strided_slice %54 {offsets = [0, 0], sizes = [16, 16], strides = [1, 1]} : vector<16x96xbf16> to vector<16x16xbf16>
    %57 = vector.shape_cast %56 : vector<16x16xbf16> to vector<2x8x16xbf16>
    %58 = vector.extract_strided_slice %54 {offsets = [0, 32], sizes = [16, 16], strides = [1, 1]} : vector<16x96xbf16> to vector<16x16xbf16>
    %59 = vector.shape_cast %58 : vector<16x16xbf16> to vector<2x8x16xbf16>
    %60 = vector.extract_strided_slice %54 {offsets = [0, 64], sizes = [16, 16], strides = [1, 1]} : vector<16x96xbf16> to vector<16x16xbf16>
    %61 = vector.shape_cast %60 : vector<16x16xbf16> to vector<2x8x16xbf16>
    "tpu.trace_start"() <{level = 10 : i32, message = "bqd,bkd->bqk"}> : () -> ()
    %cst_21 = arith.constant dense<0.000000e+00> : vector<2x8x8xf32>
    %62 = tpu.matmul %57, %59, %cst_21 {dimension_numbers = #tpu.dot_dimension_numbers<[2], [2], [1], [1], [0, 0, 0, 1, 1, 1], [0], [0]>} : vector<2x8x16xbf16>, vector<2x8x16xbf16>, vector<2x8x8xf32> -> vector<2x8x8xf32>
    "tpu.trace_stop"() : () -> ()
    %63 = arith.addf %62, %47 : vector<2x8x8xf32>
    %cst_22 = arith.constant dense<0xFF800000> : vector<2x8xf32>
    %64 = vector.multi_reduction <maximumf>, %63, %cst_22 [2] : vector<2x8x8xf32> to vector<2x8xf32>
    %65 = vector.shape_cast %64 : vector<2x8xf32> to vector<2x8x1xf32>
    %66 = vector.broadcast %65 : vector<2x8x1xf32> to vector<2x8x8xf32>
    %67 = arith.subf %63, %66 : vector<2x8x8xf32>
    %68 = math.exp %67 : vector<2x8x8xf32>
    %cst_23 = arith.constant dense<0.000000e+00> : vector<2x8xf32>
    %69 = vector.multi_reduction <add>, %68, %cst_23 [2] : vector<2x8x8xf32> to vector<2x8xf32>
    %70 = vector.shape_cast %69 : vector<2x8xf32> to vector<2x8x1xf32>
    %71 = tpu.reciprocal %70 {approx = true} : vector<2x8x1xf32> -> vector<2x8x1xf32>
    %72 = vector.broadcast %71 : vector<2x8x1xf32> to vector<2x8x8xf32>
    %73 = arith.mulf %68, %72 : vector<2x8x8xf32>
    %74 = arith.truncf %73 : vector<2x8x8xf32> to vector<2x8x8xbf16>
    "tpu.trace_start"() <{level = 10 : i32, message = "bqk,bkd->bqd"}> : () -> ()
    %cst_24 = arith.constant dense<0.000000e+00> : vector<2x8x16xf32>
    %75 = tpu.matmul %74, %61, %cst_24 {dimension_numbers = #tpu.dot_dimension_numbers<[2], [1], [1], [2], [0, 0, 0, 1, 1, 2], [0], [0]>} : vector<2x8x8xbf16>, vector<2x8x16xbf16>, vector<2x8x16xf32> -> vector<2x8x16xf32>
    "tpu.trace_stop"() : () -> ()
    %76 = vector.shape_cast %75 : vector<2x8x16xf32> to vector<16x16xf32>
    %c32 = arith.constant 32 : index
    %c0_25 = arith.constant 0 : index
    %77 = vector.load %arg3[%c32, %c0_25] : memref<384x128xbf16, #tpu.memory_space<vmem>>, vector<16x32xbf16>
    %78 = arith.truncf %76 : vector<16x16xf32> to vector<16x16xbf16>
    %cst_26 = arith.constant dense<0.000000e+00> : vector<16x32xf32>
    %79 = tpu.matmul %78, %77, %cst_26 {dimension_numbers = #tpu.dot_dimension_numbers<[1], [0], [0], [1], [0, 0, 1, 1], [], []>} : vector<16x16xbf16>, vector<16x32xbf16>, vector<16x32xf32> -> vector<16x32xf32>
    %80 = arith.addf %55, %79 : vector<16x32xf32>
    %81 = vector.extract_strided_slice %54 {offsets = [0, 16], sizes = [16, 16], strides = [1, 1]} : vector<16x96xbf16> to vector<16x16xbf16>
    %82 = vector.shape_cast %81 : vector<16x16xbf16> to vector<2x8x16xbf16>
    %83 = vector.extract_strided_slice %54 {offsets = [0, 48], sizes = [16, 16], strides = [1, 1]} : vector<16x96xbf16> to vector<16x16xbf16>
    %84 = vector.shape_cast %83 : vector<16x16xbf16> to vector<2x8x16xbf16>
    %85 = vector.extract_strided_slice %54 {offsets = [0, 80], sizes = [16, 16], strides = [1, 1]} : vector<16x96xbf16> to vector<16x16xbf16>
    %86 = vector.shape_cast %85 : vector<16x16xbf16> to vector<2x8x16xbf16>
    "tpu.trace_start"() <{level = 10 : i32, message = "bqd,bkd->bqk"}> : () -> ()
    %cst_27 = arith.constant dense<0.000000e+00> : vector<2x8x8xf32>
    %87 = tpu.matmul %82, %84, %cst_27 {dimension_numbers = #tpu.dot_dimension_numbers<[2], [2], [1], [1], [0, 0, 0, 1, 1, 1], [0], [0]>} : vector<2x8x16xbf16>, vector<2x8x16xbf16>, vector<2x8x8xf32> -> vector<2x8x8xf32>
    "tpu.trace_stop"() : () -> ()
    %88 = arith.addf %87, %47 : vector<2x8x8xf32>
    %cst_28 = arith.constant dense<0xFF800000> : vector<2x8xf32>
    %89 = vector.multi_reduction <maximumf>, %88, %cst_28 [2] : vector<2x8x8xf32> to vector<2x8xf32>
    %90 = vector.shape_cast %89 : vector<2x8xf32> to vector<2x8x1xf32>
    %91 = vector.broadcast %90 : vector<2x8x1xf32> to vector<2x8x8xf32>
    %92 = arith.subf %88, %91 : vector<2x8x8xf32>
    %93 = math.exp %92 : vector<2x8x8xf32>
    %cst_29 = arith.constant dense<0.000000e+00> : vector<2x8xf32>
    %94 = vector.multi_reduction <add>, %93, %cst_29 [2] : vector<2x8x8xf32> to vector<2x8xf32>
    %95 = vector.shape_cast %94 : vector<2x8xf32> to vector<2x8x1xf32>
    %96 = tpu.reciprocal %95 {approx = true} : vector<2x8x1xf32> -> vector<2x8x1xf32>
    %97 = vector.broadcast %96 : vector<2x8x1xf32> to vector<2x8x8xf32>
    %98 = arith.mulf %93, %97 : vector<2x8x8xf32>
    %99 = arith.truncf %98 : vector<2x8x8xf32> to vector<2x8x8xbf16>
    "tpu.trace_start"() <{level = 10 : i32, message = "bqk,bkd->bqd"}> : () -> ()
    %cst_30 = arith.constant dense<0.000000e+00> : vector<2x8x16xf32>
    %100 = tpu.matmul %99, %86, %cst_30 {dimension_numbers = #tpu.dot_dimension_numbers<[2], [1], [1], [2], [0, 0, 0, 1, 1, 2], [0], [0]>} : vector<2x8x8xbf16>, vector<2x8x16xbf16>, vector<2x8x16xf32> -> vector<2x8x16xf32>
    "tpu.trace_stop"() : () -> ()
    %101 = vector.shape_cast %100 : vector<2x8x16xf32> to vector<16x16xf32>
    %c48 = arith.constant 48 : index
    %c0_31 = arith.constant 0 : index
    %102 = vector.load %arg3[%c48, %c0_31] : memref<384x128xbf16, #tpu.memory_space<vmem>>, vector<16x32xbf16>
    %103 = arith.truncf %101 : vector<16x16xf32> to vector<16x16xbf16>
    %cst_32 = arith.constant dense<0.000000e+00> : vector<16x32xf32>
    %104 = tpu.matmul %103, %102, %cst_32 {dimension_numbers = #tpu.dot_dimension_numbers<[1], [0], [0], [1], [0, 0, 1, 1], [], []>} : vector<16x16xbf16>, vector<16x32xbf16>, vector<16x32xf32> -> vector<16x32xf32>
    %105 = arith.addf %80, %104 : vector<16x32xf32>
    %106 = arith.addf %38, %105 : vector<16x32xf32>
    %c77 = arith.constant 77 : index
    %c0_33 = arith.constant 0 : index
    %107 = vector.load %arg2[%c77, %c0_33] : memref<96x128xf32, #tpu.memory_space<vmem>>, vector<1x32xf32>
    %108 = vector.broadcast %107 : vector<1x32xf32> to vector<16x32xf32>
    %109 = arith.addf %106, %108 : vector<16x32xf32>
    %c78 = arith.constant 78 : index
    %c0_34 = arith.constant 0 : index
    %110 = vector.load %arg2[%c78, %c0_34] : memref<96x128xf32, #tpu.memory_space<vmem>>, vector<1x32xf32>
    %c79 = arith.constant 79 : index
    %c0_35 = arith.constant 0 : index
    %111 = vector.load %arg2[%c79, %c0_35] : memref<96x128xf32, #tpu.memory_space<vmem>>, vector<1x32xf32>
    %cst_36 = arith.constant dense<0.000000e+00> : vector<16xf32>
    %112 = vector.multi_reduction <add>, %109, %cst_36 [1] : vector<16x32xf32> to vector<16xf32>
    %113 = vector.shape_cast %112 : vector<16xf32> to vector<16x1xf32>
    %cst_37 = arith.constant 3.200000e+01 : f32
    %114 = vector.broadcast %cst_37 : f32 to vector<16x1xf32>
    %115 = arith.divf %113, %114 : vector<16x1xf32>
    %116 = vector.broadcast %115 : vector<16x1xf32> to vector<16x32xf32>
    %117 = arith.subf %109, %116 : vector<16x32xf32>
    %118 = arith.mulf %117, %117 : vector<16x32xf32>
    %cst_38 = arith.constant dense<0.000000e+00> : vector<16xf32>
    %119 = vector.multi_reduction <add>, %118, %cst_38 [1] : vector<16x32xf32> to vector<16xf32>
    %120 = vector.shape_cast %119 : vector<16xf32> to vector<16x1xf32>
    %cst_39 = arith.constant 3.200000e+01 : f32
    %121 = vector.broadcast %cst_39 : f32 to vector<16x1xf32>
    %122 = arith.divf %120, %121 : vector<16x1xf32>
    %cst_40 = arith.constant 9.99999996E-13 : f32
    %123 = vector.broadcast %cst_40 : f32 to vector<16x1xf32>
    %124 = arith.addf %122, %123 : vector<16x1xf32>
    %125 = math.rsqrt %124 : vector<16x1xf32>
    %126 = vector.broadcast %125 : vector<16x1xf32> to vector<16x32xf32>
    %127 = arith.mulf %117, %126 : vector<16x32xf32>
    %128 = vector.broadcast %110 : vector<1x32xf32> to vector<16x32xf32>
    %129 = arith.mulf %127, %128 : vector<16x32xf32>
    %130 = vector.broadcast %111 : vector<1x32xf32> to vector<16x32xf32>
    %131 = arith.addf %129, %130 : vector<16x32xf32>
    %c64 = arith.constant 64 : index
    %c0_41 = arith.constant 0 : index
    %132 = vector.load %arg3[%c64, %c0_41] : memref<384x128xbf16, #tpu.memory_space<vmem>>, vector<32x64xbf16>
    %133 = arith.truncf %131 : vector<16x32xf32> to vector<16x32xbf16>
    %cst_42 = arith.constant dense<0.000000e+00> : vector<16x64xf32>
    %134 = tpu.matmul %133, %132, %cst_42 {dimension_numbers = #tpu.dot_dimension_numbers<[1], [0], [0], [1], [0, 0, 1, 1], [], []>} : vector<16x32xbf16>, vector<32x64xbf16>, vector<16x64xf32> -> vector<16x64xf32>
    %c80 = arith.constant 80 : index
    %c0_43 = arith.constant 0 : index
    %135 = vector.load %arg2[%c80, %c0_43] : memref<96x128xf32, #tpu.memory_space<vmem>>, vector<1x64xf32>
    %136 = vector.broadcast %135 : vector<1x64xf32> to vector<16x64xf32>
    %137 = arith.addf %134, %136 : vector<16x64xf32>
    %cst_44 = arith.constant 5.000000e-01 : f32
    %138 = vector.broadcast %cst_44 : f32 to vector<16x64xf32>
    %139 = arith.mulf %138, %137 : vector<16x64xf32>
    %cst_45 = arith.constant 4.471500e-02 : f32
    %140 = vector.broadcast %cst_45 : f32 to vector<16x64xf32>
    %141 = arith.mulf %140, %137 : vector<16x64xf32>
    %142 = arith.mulf %141, %137 : vector<16x64xf32>
    %143 = arith.mulf %142, %137 : vector<16x64xf32>
    %144 = arith.addf %137, %143 : vector<16x64xf32>
    %cst_46 = arith.constant 0.797884583 : f32
    %145 = vector.broadcast %cst_46 : f32 to vector<16x64xf32>
    %146 = arith.mulf %145, %144 : vector<16x64xf32>
    %147 = math.tanh %146 : vector<16x64xf32>
    %cst_47 = arith.constant 1.000000e+00 : f32
    %148 = vector.broadcast %cst_47 : f32 to vector<16x64xf32>
    %149 = arith.addf %148, %147 : vector<16x64xf32>
    %150 = arith.mulf %139, %149 : vector<16x64xf32>
    %c96 = arith.constant 96 : index
    %c0_48 = arith.constant 0 : index
    %151 = vector.load %arg3[%c96, %c0_48] : memref<384x128xbf16, #tpu.memory_space<vmem>>, vector<64x32xbf16>
    %152 = arith.truncf %150 : vector<16x64xf32> to vector<16x64xbf16>
    %cst_49 = arith.constant dense<0.000000e+00> : vector<16x32xf32>
    %153 = tpu.matmul %152, %151, %cst_49 {dimension_numbers = #tpu.dot_dimension_numbers<[1], [0], [0], [1], [0, 0, 1, 1], [], []>} : vector<16x64xbf16>, vector<64x32xbf16>, vector<16x32xf32> -> vector<16x32xf32>
    %c81 = arith.constant 81 : index
    %c0_50 = arith.constant 0 : index
    %154 = vector.load %arg2[%c81, %c0_50] : memref<96x128xf32, #tpu.memory_space<vmem>>, vector<1x32xf32>
    %155 = vector.broadcast %154 : vector<1x32xf32> to vector<16x32xf32>
    %156 = arith.addf %153, %155 : vector<16x32xf32>
    %157 = arith.addf %131, %156 : vector<16x32xf32>
    %c82 = arith.constant 82 : index
    %c0_51 = arith.constant 0 : index
    %158 = vector.load %arg2[%c82, %c0_51] : memref<96x128xf32, #tpu.memory_space<vmem>>, vector<1x32xf32>
    %c83 = arith.constant 83 : index
    %c0_52 = arith.constant 0 : index
    %159 = vector.load %arg2[%c83, %c0_52] : memref<96x128xf32, #tpu.memory_space<vmem>>, vector<1x32xf32>
    %cst_53 = arith.constant dense<0.000000e+00> : vector<16xf32>
    %160 = vector.multi_reduction <add>, %157, %cst_53 [1] : vector<16x32xf32> to vector<16xf32>
    %161 = vector.shape_cast %160 : vector<16xf32> to vector<16x1xf32>
    %cst_54 = arith.constant 3.200000e+01 : f32
    %162 = vector.broadcast %cst_54 : f32 to vector<16x1xf32>
    %163 = arith.divf %161, %162 : vector<16x1xf32>
    %164 = vector.broadcast %163 : vector<16x1xf32> to vector<16x32xf32>
    %165 = arith.subf %157, %164 : vector<16x32xf32>
    %166 = arith.mulf %165, %165 : vector<16x32xf32>
    %cst_55 = arith.constant dense<0.000000e+00> : vector<16xf32>
    %167 = vector.multi_reduction <add>, %166, %cst_55 [1] : vector<16x32xf32> to vector<16xf32>
    %168 = vector.shape_cast %167 : vector<16xf32> to vector<16x1xf32>
    %cst_56 = arith.constant 3.200000e+01 : f32
    %169 = vector.broadcast %cst_56 : f32 to vector<16x1xf32>
    %170 = arith.divf %168, %169 : vector<16x1xf32>
    %cst_57 = arith.constant 9.99999996E-13 : f32
    %171 = vector.broadcast %cst_57 : f32 to vector<16x1xf32>
    %172 = arith.addf %170, %171 : vector<16x1xf32>
    %173 = math.rsqrt %172 : vector<16x1xf32>
    %174 = vector.broadcast %173 : vector<16x1xf32> to vector<16x32xf32>
    %175 = arith.mulf %165, %174 : vector<16x32xf32>
    %176 = vector.broadcast %158 : vector<1x32xf32> to vector<16x32xf32>
    %177 = arith.mulf %175, %176 : vector<16x32xf32>
    %178 = vector.broadcast %159 : vector<1x32xf32> to vector<16x32xf32>
    %179 = arith.addf %177, %178 : vector<16x32xf32>
    %c160 = arith.constant 160 : index
    %c0_58 = arith.constant 0 : index
    %180 = vector.load %arg3[%c160, %c0_58] : memref<384x128xbf16, #tpu.memory_space<vmem>>, vector<32x96xbf16>
    %181 = arith.truncf %179 : vector<16x32xf32> to vector<16x32xbf16>
    %cst_59 = arith.constant dense<0.000000e+00> : vector<16x96xf32>
    %182 = tpu.matmul %181, %180, %cst_59 {dimension_numbers = #tpu.dot_dimension_numbers<[1], [0], [0], [1], [0, 0, 1, 1], [], []>} : vector<16x32xbf16>, vector<32x96xbf16>, vector<16x96xf32> -> vector<16x96xf32>
    %c84 = arith.constant 84 : index
    %c0_60 = arith.constant 0 : index
    %183 = vector.load %arg2[%c84, %c0_60] : memref<96x128xf32, #tpu.memory_space<vmem>>, vector<1x96xf32>
    %184 = vector.broadcast %183 : vector<1x96xf32> to vector<16x96xf32>
    %185 = arith.addf %182, %184 : vector<16x96xf32>
    %186 = arith.truncf %185 : vector<16x96xf32> to vector<16x96xbf16>
    %cst_61 = arith.constant 0.000000e+00 : f32
    %187 = vector.broadcast %cst_61 : f32 to vector<16x32xf32>
    %188 = vector.extract_strided_slice %186 {offsets = [0, 0], sizes = [16, 16], strides = [1, 1]} : vector<16x96xbf16> to vector<16x16xbf16>
    %189 = vector.shape_cast %188 : vector<16x16xbf16> to vector<2x8x16xbf16>
    %190 = vector.extract_strided_slice %186 {offsets = [0, 32], sizes = [16, 16], strides = [1, 1]} : vector<16x96xbf16> to vector<16x16xbf16>
    %191 = vector.shape_cast %190 : vector<16x16xbf16> to vector<2x8x16xbf16>
    %192 = vector.extract_strided_slice %186 {offsets = [0, 64], sizes = [16, 16], strides = [1, 1]} : vector<16x96xbf16> to vector<16x16xbf16>
    %193 = vector.shape_cast %192 : vector<16x16xbf16> to vector<2x8x16xbf16>
    "tpu.trace_start"() <{level = 10 : i32, message = "bqd,bkd->bqk"}> : () -> ()
    %cst_62 = arith.constant dense<0.000000e+00> : vector<2x8x8xf32>
    %194 = tpu.matmul %189, %191, %cst_62 {dimension_numbers = #tpu.dot_dimension_numbers<[2], [2], [1], [1], [0, 0, 0, 1, 1, 1], [0], [0]>} : vector<2x8x16xbf16>, vector<2x8x16xbf16>, vector<2x8x8xf32> -> vector<2x8x8xf32>
    "tpu.trace_stop"() : () -> ()
    %195 = arith.addf %194, %47 : vector<2x8x8xf32>
    %cst_63 = arith.constant dense<0xFF800000> : vector<2x8xf32>
    %196 = vector.multi_reduction <maximumf>, %195, %cst_63 [2] : vector<2x8x8xf32> to vector<2x8xf32>
    %197 = vector.shape_cast %196 : vector<2x8xf32> to vector<2x8x1xf32>
    %198 = vector.broadcast %197 : vector<2x8x1xf32> to vector<2x8x8xf32>
    %199 = arith.subf %195, %198 : vector<2x8x8xf32>
    %200 = math.exp %199 : vector<2x8x8xf32>
    %cst_64 = arith.constant dense<0.000000e+00> : vector<2x8xf32>
    %201 = vector.multi_reduction <add>, %200, %cst_64 [2] : vector<2x8x8xf32> to vector<2x8xf32>
    %202 = vector.shape_cast %201 : vector<2x8xf32> to vector<2x8x1xf32>
    %203 = tpu.reciprocal %202 {approx = true} : vector<2x8x1xf32> -> vector<2x8x1xf32>
    %204 = vector.broadcast %203 : vector<2x8x1xf32> to vector<2x8x8xf32>
    %205 = arith.mulf %200, %204 : vector<2x8x8xf32>
    %206 = arith.truncf %205 : vector<2x8x8xf32> to vector<2x8x8xbf16>
    "tpu.trace_start"() <{level = 10 : i32, message = "bqk,bkd->bqd"}> : () -> ()
    %cst_65 = arith.constant dense<0.000000e+00> : vector<2x8x16xf32>
    %207 = tpu.matmul %206, %193, %cst_65 {dimension_numbers = #tpu.dot_dimension_numbers<[2], [1], [1], [2], [0, 0, 0, 1, 1, 2], [0], [0]>} : vector<2x8x8xbf16>, vector<2x8x16xbf16>, vector<2x8x16xf32> -> vector<2x8x16xf32>
    "tpu.trace_stop"() : () -> ()
    %208 = vector.shape_cast %207 : vector<2x8x16xf32> to vector<16x16xf32>
    %c192 = arith.constant 192 : index
    %c0_66 = arith.constant 0 : index
    %209 = vector.load %arg3[%c192, %c0_66] : memref<384x128xbf16, #tpu.memory_space<vmem>>, vector<16x32xbf16>
    %210 = arith.truncf %208 : vector<16x16xf32> to vector<16x16xbf16>
    %cst_67 = arith.constant dense<0.000000e+00> : vector<16x32xf32>
    %211 = tpu.matmul %210, %209, %cst_67 {dimension_numbers = #tpu.dot_dimension_numbers<[1], [0], [0], [1], [0, 0, 1, 1], [], []>} : vector<16x16xbf16>, vector<16x32xbf16>, vector<16x32xf32> -> vector<16x32xf32>
    %212 = arith.addf %187, %211 : vector<16x32xf32>
    %213 = vector.extract_strided_slice %186 {offsets = [0, 16], sizes = [16, 16], strides = [1, 1]} : vector<16x96xbf16> to vector<16x16xbf16>
    %214 = vector.shape_cast %213 : vector<16x16xbf16> to vector<2x8x16xbf16>
    %215 = vector.extract_strided_slice %186 {offsets = [0, 48], sizes = [16, 16], strides = [1, 1]} : vector<16x96xbf16> to vector<16x16xbf16>
    %216 = vector.shape_cast %215 : vector<16x16xbf16> to vector<2x8x16xbf16>
    %217 = vector.extract_strided_slice %186 {offsets = [0, 80], sizes = [16, 16], strides = [1, 1]} : vector<16x96xbf16> to vector<16x16xbf16>
    %218 = vector.shape_cast %217 : vector<16x16xbf16> to vector<2x8x16xbf16>
    "tpu.trace_start"() <{level = 10 : i32, message = "bqd,bkd->bqk"}> : () -> ()
    %cst_68 = arith.constant dense<0.000000e+00> : vector<2x8x8xf32>
    %219 = tpu.matmul %214, %216, %cst_68 {dimension_numbers = #tpu.dot_dimension_numbers<[2], [2], [1], [1], [0, 0, 0, 1, 1, 1], [0], [0]>} : vector<2x8x16xbf16>, vector<2x8x16xbf16>, vector<2x8x8xf32> -> vector<2x8x8xf32>
    "tpu.trace_stop"() : () -> ()
    %220 = arith.addf %219, %47 : vector<2x8x8xf32>
    %cst_69 = arith.constant dense<0xFF800000> : vector<2x8xf32>
    %221 = vector.multi_reduction <maximumf>, %220, %cst_69 [2] : vector<2x8x8xf32> to vector<2x8xf32>
    %222 = vector.shape_cast %221 : vector<2x8xf32> to vector<2x8x1xf32>
    %223 = vector.broadcast %222 : vector<2x8x1xf32> to vector<2x8x8xf32>
    %224 = arith.subf %220, %223 : vector<2x8x8xf32>
    %225 = math.exp %224 : vector<2x8x8xf32>
    %cst_70 = arith.constant dense<0.000000e+00> : vector<2x8xf32>
    %226 = vector.multi_reduction <add>, %225, %cst_70 [2] : vector<2x8x8xf32> to vector<2x8xf32>
    %227 = vector.shape_cast %226 : vector<2x8xf32> to vector<2x8x1xf32>
    %228 = tpu.reciprocal %227 {approx = true} : vector<2x8x1xf32> -> vector<2x8x1xf32>
    %229 = vector.broadcast %228 : vector<2x8x1xf32> to vector<2x8x8xf32>
    %230 = arith.mulf %225, %229 : vector<2x8x8xf32>
    %231 = arith.truncf %230 : vector<2x8x8xf32> to vector<2x8x8xbf16>
    "tpu.trace_start"() <{level = 10 : i32, message = "bqk,bkd->bqd"}> : () -> ()
    %cst_71 = arith.constant dense<0.000000e+00> : vector<2x8x16xf32>
    %232 = tpu.matmul %231, %218, %cst_71 {dimension_numbers = #tpu.dot_dimension_numbers<[2], [1], [1], [2], [0, 0, 0, 1, 1, 2], [0], [0]>} : vector<2x8x8xbf16>, vector<2x8x16xbf16>, vector<2x8x16xf32> -> vector<2x8x16xf32>
    "tpu.trace_stop"() : () -> ()
    %233 = vector.shape_cast %232 : vector<2x8x16xf32> to vector<16x16xf32>
    %c208 = arith.constant 208 : index
    %c0_72 = arith.constant 0 : index
    %234 = vector.load %arg3[%c208, %c0_72] : memref<384x128xbf16, #tpu.memory_space<vmem>>, vector<16x32xbf16>
    %235 = arith.truncf %233 : vector<16x16xf32> to vector<16x16xbf16>
    %cst_73 = arith.constant dense<0.000000e+00> : vector<16x32xf32>
    %236 = tpu.matmul %235, %234, %cst_73 {dimension_numbers = #tpu.dot_dimension_numbers<[1], [0], [0], [1], [0, 0, 1, 1], [], []>} : vector<16x16xbf16>, vector<16x32xbf16>, vector<16x32xf32> -> vector<16x32xf32>
    %237 = arith.addf %212, %236 : vector<16x32xf32>
    %238 = arith.addf %179, %237 : vector<16x32xf32>
    %c85 = arith.constant 85 : index
    %c0_74 = arith.constant 0 : index
    %239 = vector.load %arg2[%c85, %c0_74] : memref<96x128xf32, #tpu.memory_space<vmem>>, vector<1x32xf32>
    %240 = vector.broadcast %239 : vector<1x32xf32> to vector<16x32xf32>
    %241 = arith.addf %238, %240 : vector<16x32xf32>
    %c86 = arith.constant 86 : index
    %c0_75 = arith.constant 0 : index
    %242 = vector.load %arg2[%c86, %c0_75] : memref<96x128xf32, #tpu.memory_space<vmem>>, vector<1x32xf32>
    %c87 = arith.constant 87 : index
    %c0_76 = arith.constant 0 : index
    %243 = vector.load %arg2[%c87, %c0_76] : memref<96x128xf32, #tpu.memory_space<vmem>>, vector<1x32xf32>
    %cst_77 = arith.constant dense<0.000000e+00> : vector<16xf32>
    %244 = vector.multi_reduction <add>, %241, %cst_77 [1] : vector<16x32xf32> to vector<16xf32>
    %245 = vector.shape_cast %244 : vector<16xf32> to vector<16x1xf32>
    %cst_78 = arith.constant 3.200000e+01 : f32
    %246 = vector.broadcast %cst_78 : f32 to vector<16x1xf32>
    %247 = arith.divf %245, %246 : vector<16x1xf32>
    %248 = vector.broadcast %247 : vector<16x1xf32> to vector<16x32xf32>
    %249 = arith.subf %241, %248 : vector<16x32xf32>
    %250 = arith.mulf %249, %249 : vector<16x32xf32>
    %cst_79 = arith.constant dense<0.000000e+00> : vector<16xf32>
    %251 = vector.multi_reduction <add>, %250, %cst_79 [1] : vector<16x32xf32> to vector<16xf32>
    %252 = vector.shape_cast %251 : vector<16xf32> to vector<16x1xf32>
    %cst_80 = arith.constant 3.200000e+01 : f32
    %253 = vector.broadcast %cst_80 : f32 to vector<16x1xf32>
    %254 = arith.divf %252, %253 : vector<16x1xf32>
    %cst_81 = arith.constant 9.99999996E-13 : f32
    %255 = vector.broadcast %cst_81 : f32 to vector<16x1xf32>
    %256 = arith.addf %254, %255 : vector<16x1xf32>
    %257 = math.rsqrt %256 : vector<16x1xf32>
    %258 = vector.broadcast %257 : vector<16x1xf32> to vector<16x32xf32>
    %259 = arith.mulf %249, %258 : vector<16x32xf32>
    %260 = vector.broadcast %242 : vector<1x32xf32> to vector<16x32xf32>
    %261 = arith.mulf %259, %260 : vector<16x32xf32>
    %262 = vector.broadcast %243 : vector<1x32xf32> to vector<16x32xf32>
    %263 = arith.addf %261, %262 : vector<16x32xf32>
    %c224 = arith.constant 224 : index
    %c0_82 = arith.constant 0 : index
    %264 = vector.load %arg3[%c224, %c0_82] : memref<384x128xbf16, #tpu.memory_space<vmem>>, vector<32x64xbf16>
    %265 = arith.truncf %263 : vector<16x32xf32> to vector<16x32xbf16>
    %cst_83 = arith.constant dense<0.000000e+00> : vector<16x64xf32>
    %266 = tpu.matmul %265, %264, %cst_83 {dimension_numbers = #tpu.dot_dimension_numbers<[1], [0], [0], [1], [0, 0, 1, 1], [], []>} : vector<16x32xbf16>, vector<32x64xbf16>, vector<16x64xf32> -> vector<16x64xf32>
    %c88 = arith.constant 88 : index
    %c0_84 = arith.constant 0 : index
    %267 = vector.load %arg2[%c88, %c0_84] : memref<96x128xf32, #tpu.memory_space<vmem>>, vector<1x64xf32>
    %268 = vector.broadcast %267 : vector<1x64xf32> to vector<16x64xf32>
    %269 = arith.addf %266, %268 : vector<16x64xf32>
    %cst_85 = arith.constant 5.000000e-01 : f32
    %270 = vector.broadcast %cst_85 : f32 to vector<16x64xf32>
    %271 = arith.mulf %270, %269 : vector<16x64xf32>
    %cst_86 = arith.constant 4.471500e-02 : f32
    %272 = vector.broadcast %cst_86 : f32 to vector<16x64xf32>
    %273 = arith.mulf %272, %269 : vector<16x64xf32>
    %274 = arith.mulf %273, %269 : vector<16x64xf32>
    %275 = arith.mulf %274, %269 : vector<16x64xf32>
    %276 = arith.addf %269, %275 : vector<16x64xf32>
    %cst_87 = arith.constant 0.797884583 : f32
    %277 = vector.broadcast %cst_87 : f32 to vector<16x64xf32>
    %278 = arith.mulf %277, %276 : vector<16x64xf32>
    %279 = math.tanh %278 : vector<16x64xf32>
    %cst_88 = arith.constant 1.000000e+00 : f32
    %280 = vector.broadcast %cst_88 : f32 to vector<16x64xf32>
    %281 = arith.addf %280, %279 : vector<16x64xf32>
    %282 = arith.mulf %271, %281 : vector<16x64xf32>
    %c256 = arith.constant 256 : index
    %c0_89 = arith.constant 0 : index
    %283 = vector.load %arg3[%c256, %c0_89] : memref<384x128xbf16, #tpu.memory_space<vmem>>, vector<64x32xbf16>
    %284 = arith.truncf %282 : vector<16x64xf32> to vector<16x64xbf16>
    %cst_90 = arith.constant dense<0.000000e+00> : vector<16x32xf32>
    %285 = tpu.matmul %284, %283, %cst_90 {dimension_numbers = #tpu.dot_dimension_numbers<[1], [0], [0], [1], [0, 0, 1, 1], [], []>} : vector<16x64xbf16>, vector<64x32xbf16>, vector<16x32xf32> -> vector<16x32xf32>
    %c89 = arith.constant 89 : index
    %c0_91 = arith.constant 0 : index
    %286 = vector.load %arg2[%c89, %c0_91] : memref<96x128xf32, #tpu.memory_space<vmem>>, vector<1x32xf32>
    %287 = vector.broadcast %286 : vector<1x32xf32> to vector<16x32xf32>
    %288 = arith.addf %285, %287 : vector<16x32xf32>
    %289 = arith.addf %263, %288 : vector<16x32xf32>
    %c90 = arith.constant 90 : index
    %c0_92 = arith.constant 0 : index
    %290 = vector.load %arg2[%c90, %c0_92] : memref<96x128xf32, #tpu.memory_space<vmem>>, vector<1x32xf32>
    %c91 = arith.constant 91 : index
    %c0_93 = arith.constant 0 : index
    %291 = vector.load %arg2[%c91, %c0_93] : memref<96x128xf32, #tpu.memory_space<vmem>>, vector<1x32xf32>
    %cst_94 = arith.constant dense<0.000000e+00> : vector<16xf32>
    %292 = vector.multi_reduction <add>, %289, %cst_94 [1] : vector<16x32xf32> to vector<16xf32>
    %293 = vector.shape_cast %292 : vector<16xf32> to vector<16x1xf32>
    %cst_95 = arith.constant 3.200000e+01 : f32
    %294 = vector.broadcast %cst_95 : f32 to vector<16x1xf32>
    %295 = arith.divf %293, %294 : vector<16x1xf32>
    %296 = vector.broadcast %295 : vector<16x1xf32> to vector<16x32xf32>
    %297 = arith.subf %289, %296 : vector<16x32xf32>
    %298 = arith.mulf %297, %297 : vector<16x32xf32>
    %cst_96 = arith.constant dense<0.000000e+00> : vector<16xf32>
    %299 = vector.multi_reduction <add>, %298, %cst_96 [1] : vector<16x32xf32> to vector<16xf32>
    %300 = vector.shape_cast %299 : vector<16xf32> to vector<16x1xf32>
    %cst_97 = arith.constant 3.200000e+01 : f32
    %301 = vector.broadcast %cst_97 : f32 to vector<16x1xf32>
    %302 = arith.divf %300, %301 : vector<16x1xf32>
    %cst_98 = arith.constant 9.99999996E-13 : f32
    %303 = vector.broadcast %cst_98 : f32 to vector<16x1xf32>
    %304 = arith.addf %302, %303 : vector<16x1xf32>
    %305 = math.rsqrt %304 : vector<16x1xf32>
    %306 = vector.broadcast %305 : vector<16x1xf32> to vector<16x32xf32>
    %307 = arith.mulf %297, %306 : vector<16x32xf32>
    %308 = vector.broadcast %290 : vector<1x32xf32> to vector<16x32xf32>
    %309 = arith.mulf %307, %308 : vector<16x32xf32>
    %310 = vector.broadcast %291 : vector<1x32xf32> to vector<16x32xf32>
    %311 = arith.addf %309, %310 : vector<16x32xf32>
    %312 = vector.shape_cast %311 : vector<16x32xf32> to vector<2x8x32xf32>
    %313 = vector.extract_strided_slice %312 {offsets = [0, 0, 0], sizes = [2, 1, 32], strides = [1, 1, 1]} : vector<2x8x32xf32> to vector<2x1x32xf32>
    %314 = vector.shape_cast %313 : vector<2x1x32xf32> to vector<2x32xf32>
    %c320 = arith.constant 320 : index
    %c0_99 = arith.constant 0 : index
    %315 = vector.load %arg3[%c320, %c0_99] : memref<384x128xbf16, #tpu.memory_space<vmem>>, vector<32x32xbf16>
    %316 = arith.truncf %314 : vector<2x32xf32> to vector<2x32xbf16>
    %cst_100 = arith.constant dense<0.000000e+00> : vector<2x32xf32>
    %317 = tpu.matmul %316, %315, %cst_100 {dimension_numbers = #tpu.dot_dimension_numbers<[1], [0], [0], [1], [0, 0, 1, 1], [], []>} : vector<2x32xbf16>, vector<32x32xbf16>, vector<2x32xf32> -> vector<2x32xf32>
    %c92 = arith.constant 92 : index
    %c0_101 = arith.constant 0 : index
    %318 = vector.load %arg2[%c92, %c0_101] : memref<96x128xf32, #tpu.memory_space<vmem>>, vector<1x32xf32>
    %319 = vector.broadcast %318 : vector<1x32xf32> to vector<2x32xf32>
    %320 = arith.addf %317, %319 : vector<2x32xf32>
    %321 = math.tanh %320 : vector<2x32xf32>
    %c352 = arith.constant 352 : index
    %c0_102 = arith.constant 0 : index
    %322 = vector.load %arg3[%c352, %c0_102] : memref<384x128xbf16, #tpu.memory_space<vmem>>, vector<32x128xbf16>
    %323 = arith.truncf %321 : vector<2x32xf32> to vector<2x32xbf16>
    %cst_103 = arith.constant dense<0.000000e+00> : vector<2x128xf32>
    %324 = tpu.matmul %323, %322, %cst_103 {dimension_numbers = #tpu.dot_dimension_numbers<[1], [0], [0], [1], [0, 0, 1, 1], [], []>} : vector<2x32xbf16>, vector<32x128xbf16>, vector<2x128xf32> -> vector<2x128xf32>
    %c93 = arith.constant 93 : index
    %c0_104 = arith.constant 0 : index
    %325 = vector.load %arg2[%c93, %c0_104] : memref<96x128xf32, #tpu.memory_space<vmem>>, vector<1x128xf32>
    %326 = vector.broadcast %325 : vector<1x128xf32> to vector<2x128xf32>
    %327 = arith.addf %324, %326 : vector<2x128xf32>
    %c0_105 = arith.constant 0 : index
    %c0_106 = arith.constant 0 : index
    %328 = vector.load %arg4[%c0_105, %c0_106] : memref<2x128xf32, #tpu.memory_space<vmem>>, vector<2x128xf32>
    tpu.vector_store %arg4[%c0_105, %c0_106], %327 {strides = array<i32>} : memref<2x128xf32, #tpu.memory_space<vmem>>, vector<2x128xf32>,
    return
  }
}

</mosaic_0001>

<llo_original>
// kernel: emotion_classifier_forward.1
$region0: #{emotion_classifier_forward.1}
  #allocation0 [shape = 'u32[]', space=smem, size = 0x4, offset = 0x4, fixed_abs, tag = 'smem constant byte address 0x4 - core index']
  #allocation1 [shape = 'u32[144,128]{1,0:T(1,128)}', space=vmem, size = 0x12000, scoped, tag = 'internal scratch']
  %s0 = inlined_call_operand.vmem [shape: s32[16,1], index: 0, kind: input, shape index: {}]
  %s1 = inlined_call_operand.vmem [shape: s32[2,8], index: 1, kind: input, shape index: {}]
  %s2 = inlined_call_operand.hbm [shape: f32[96,128], index: 2, kind: input, shape index: {}]
  %s3 = inlined_call_operand.hbm [shape: bf16[384,128], index: 3, kind: input, shape index: {}]
  %s4 = inlined_call_operand.hbm [shape: f32[2,128], index: 4, kind: output, shape index: {}]
  %s5 = sld [smem:[#allocation0]]
  $region34: #{emotion_classifier_forward.1} parent=0
    _
  %s7 = ssub.s32 1, %s5
  %s8 = scalar_select 0, %s7, %s5
  $region1: #{emotion_classifier_forward.1} parent=0
    #allocation2 [shape = 'u8[49152]{0}', space=vmem, size = 0xc000, scoped, tag = 'input window, operand 2, single buffered']
    #allocation3 [shape = 's32[1]{0}', space=sflag, size = 0x4, scoped, tag = 'scoped memory for emotion_classifier_forward.1']
    #allocation4 [shape = 's32[1]{0}', space=sflag, size = 0x4, scoped, tag = 'scoped memory for emotion_classifier_forward.1']
    #allocation5 [shape = 'u8[98304]{0}', space=vmem, size = 0x18000, scoped, tag = 'input window, operand 3, single buffered']
    #allocation6 [shape = 's32[1]{0}', space=sflag, size = 0x4, scoped, tag = 'scoped memory for emotion_classifier_forward.1']
    #allocation7 [shape = 'u8[1024]{0}', space=vmem, size = 0x400, scoped, tag = 'output window, operand 0, single buffered']
    %9 = vsyncpa [#allocation3], 0
    %10 = vsyncpa [#allocation6], 0
    %11 = vsyncpa [#allocation4], 0
    // Predicated region
    $region2: #{emotion_classifier_forward.1} parent=1 // pred_check
      _
    $region3: #{emotion_classifier_forward.1} parent=1 // pred_check_branch
      %13 = sbr.rel (0) target = $region5
    $region4: #{emotion_classifier_forward.1} parent=1 // pred_region
      _
    $region5: #{emotion_classifier_forward.1} parent=1 // pred_fallthru
      _
    // Predicated region
    $region6: #{emotion_classifier_forward.1} parent=1 // pred_check
      _
    $region7: #{emotion_classifier_forward.1} parent=1 // pred_check_branch
      %15 = sbr.rel (0) target = $region9
    $region8: #{emotion_classifier_forward.1} parent=1 // pred_region
      _
    $region9: #{emotion_classifier_forward.1} parent=1 // pred_fallthru
      _
    // Predicated region
    $region10: #{emotion_classifier_forward.1} parent=1 // pred_check
      _
    $region11: #{emotion_classifier_forward.1} parent=1 // pred_check_branch
      %17 = sbr.rel (0) target = $region13
    $region12: #{emotion_classifier_forward.1} parent=1 // pred_region
      %s19 = ssub.s32 1536, 1536
      %20 = vsyncadd [#allocation3], %s19
      %s21 = sshll.u32 [#allocation2], 4
      %s22 = int_to_ptr.vmem [resolvable:$true] %s21
      %27 = dma.hbm_to_vmem [thread:$0]  %s2, 1536, %s22, [#allocation3], 128, 128, 8
    $region13: #{emotion_classifier_forward.1} parent=1 // pred_fallthru
      _
    // Predicated region
    $region14: #{emotion_classifier_forward.1} parent=1 // pred_check
      _
    $region15: #{emotion_classifier_forward.1} parent=1 // pred_check_branch
      %29 = sbr.rel (0) target = $region17
    $region16: #{emotion_classifier_forward.1} parent=1 // pred_region
      %s31 = ssub.s32 3072, 3072
      %32 = vsyncadd [#allocation6], %s31
      %s33 = sshll.u32 [#allocation5], 4
      %s34 = int_to_ptr.vmem [resolvable:$true] %s33
      %39 = dma.hbm_to_vmem [thread:$0]  %s3, 3072, %s34, [#allocation6], 64, 64, 4
    $region17: #{emotion_classifier_forward.1} parent=1 // pred_fallthru
      _
    // Predicated region
    $region18: #{emotion_classifier_forward.1} parent=1 // pred_check
      _
    $region19: #{emotion_classifier_forward.1} parent=1 // pred_check_branch
      %41 = sbr.rel (0) target = $region21
    $region20: #{emotion_classifier_forward.1} parent=1 // pred_region
      %42 = dma.done [#allocation3], 1536
    $region21: #{emotion_classifier_forward.1} parent=1 // pred_fallthru
      _
    // Predicated region
    $region22: #{emotion_classifier_forward.1} parent=1 // pred_check
      _
    $region23: #{emotion_classifier_forward.1} parent=1 // pred_check_branch
      %44 = sbr.rel (0) target = $region25
    $region24: #{emotion_classifier_forward.1} parent=1 // pred_region
      %45 = dma.done [#allocation6], 3072
    $region25: #{emotion_classifier_forward.1} parent=1 // pred_fallthru
      _
    %v47 = vld [vmem:[%s0] sm:$0xff]
    %v48 = vld [vmem:[%s0 + $0x8] sm:$0xff]
    %v49 = vlaneseq
    %v50 = vand.u32 %v49, 127
    %51 = vset.pattern.permute.xlu0 0
    %52 = vperm.xlu0 %51, %v47
    %v53 = vpop.permute.xlu0 %52
    %54 = vset.pattern.permute.xlu0 0
    %55 = vperm.xlu0 %54, %v48
    %v56 = vpop.permute.xlu0 %55
    %vm57 = vcmp.eq.s32.totalorder %v50, %v53
    %vm58 = vcmp.eq.s32.totalorder %v50, %v56
    %v59 = vsel %vm57, 1, 0
    %v60 = vsel %vm58, 1, 0
    %v61 = vcvt.s32.f32 %v59
    %v62 = vcvt.s32.f32 %v60
    %v63 = vld [vmem:[#allocation2] sm:$0xff]
    %v64 = vld [vmem:[#allocation2 + $0x8] sm:$0xff]
    %v65 = vld [vmem:[#allocation2 + $0x10] sm:$0xff]
    %v66 = vld [vmem:[#allocation2 + $0x18] sm:$0xff]
    %v67 = vld [vmem:[#allocation2 + $0x20] sm:$0xff]
    %v68 = vld [vmem:[#allocation2 + $0x28] sm:$0xff]
    %v69 = vld [vmem:[#allocation2 + $0x30] sm:$0xff]
    %vm70 = vcmask 457728
    %v72 = vsel %vm70, %v61, 0
    %v75 = vsel %vm70, %v62, 0
    %77 = vmatprep.subr.mxu0 0.0
    %78 = vmatpush1.msra.mxu0 %v63
    %79 = vmatprep.subr.mxu0 0.0
    %80 = vmatpush1.msra.mxu0 %v64
    %81 = vmatprep.subr.mxu0 0.0
    %82 = vmatpush1.msra.mxu0 %v65
    %83 = vmatprep.subr.mxu0 0.0
    %84 = vmatpush1.msra.mxu0 %v66
    %85 = vmatprep.subr.mxu0 0.0
    %86 = vmatpush1.msra.mxu0 %v67
    %87 = vmatprep.subr.mxu0 0.0
    %88 = vmatpush1.msra.mxu0 %v68
    %89 = vmatprep.subr.mxu0 0.0
    %90 = vmatpush1.msra.mxu0 %v69
    %91 = vmatprep.subr.mxu0 0.0
    %92 = vmatpush1.msra.mxu0 0.0
    %93 = vmatprep.subr.mxu0 0.0
    %94 = vmatpush1.msra.mxu0 0.0
    %95 = vmatprep.subr.mxu0 0.0
    %96 = vmatpush1.msra.mxu0 0.0
    %97 = vmatprep.subr.mxu0 0.0
    %98 = vmatpush1.msra.mxu0 0.0
    %99 = vmatprep.subr.mxu0 0.0
    %100 = vmatpush1.msra.mxu0 0.0
    %101 = vmatprep.subr.mxu0 0.0
    %102 = vmatpush1.msra.mxu0 0.0
    %103 = vmatprep.subr.mxu0 0.0
    %104 = vmatpush1.msra.mxu0 0.0
    %105 = vmatprep.subr.mxu0 0.0
    %106 = vmatpush1.msra.mxu0 0.0
    %107 = vmatprep.subr.mxu0 0.0
    %108 = vmatpush1.msra.mxu0 0.0
    %109 = vmatprep.subr.mxu0 0.0
    %110 = vmatpush1.msra.mxu0 0.0
    %111 = vmatprep.subr.mxu0 0.0
    %112 = vmatpush1.msra.mxu0 0.0
    %113 = vmatprep.subr.mxu0 0.0
    %114 = vmatpush1.msra.mxu0 0.0
    %115 = vmatprep.subr.mxu0 0.0
    %116 = vmatpush1.msra.mxu0 0.0
    %117 = vmatprep.subr.mxu0 0.0
    %118 = vmatpush1.msra.mxu0 0.0
    %119 = vmatprep.subr.mxu0 0.0
    %120 = vmatpush1.msra.mxu0 0.0
    %121 = vmatprep.subr.mxu0 0.0
    %122 = vmatpush1.msra.mxu0 0.0
    %123 = vmatprep.subr.mxu0 0.0
    %124 = vmatpush1.msra.mxu0 0.0
    %125 = vmatprep.subr.mxu0 0.0
    %126 = vmatpush1.msra.mxu0 0.0
    %127 = vmatprep.subr.mxu0 0.0
    %128 = vmatpush1.msra.mxu0 0.0
    %129 = vmatprep.subr.mxu0 0.0
    %130 = vmatpush1.msra.mxu0 0.0
    %131 = vmatprep.subr.mxu0 0.0
    %132 = vmatpush1.msra.mxu0 0.0
    %133 = vmatprep.subr.mxu0 0.0
    %134 = vmatpush1.msra.mxu0 0.0
    %135 = vmatprep.subr.mxu0 0.0
    %136 = vmatpush1.msra.mxu0 0.0
    %137 = vmatprep.subr.mxu0 0.0
    %138 = vmatpush1.msra.mxu0 0.0
    %139 = vmatprep.subr.mxu0 0.0
    %140 = vmatpush1.msra.mxu0 0.0
    %141 = vmatprep.mubr.f32.mxu0 0.0
    %142 = vmatmul.mubr.f32.gmra.mrb[0].mxu0 %v72
    %v143 = vpop.f32.mrb[0].mxu0
    %v144 = vadd.f32 0.0, %v143
    %v145 = vpop.f32.mrb[0].mxu0
    %146 = vmatprep.mubr.f32.mxu0 0.0
    %147 = vmatmul.mubr.f32.gmra.mrb[0].mxu0 %v75
    %v148 = vpop.f32.mrb[0].mxu0
    %v149 = vadd.f32 0.0, %v148
    %v150 = vpop.f32.mrb[0].mxu0
    %151 = vdwg.mxu0
    %v152 = vld [vmem:[#allocation2 + $0x38] sm:$0xff]
    %v153 = vld [vmem:[#allocation2 + $0x48] sm:$0x1]
    %v154 = vlaneseq
    %v155 = vshrl.u32 %v154, 7
    %v156 = vsub.s32 0, %v155
    %v157 = vrot.slane %v153, %v156
    %v158 = vadd.f32 %v152, %v157
    %v159 = vadd.f32 %v144, %v158
    %v160 = vadd.f32 %v149, %v158
    %v161 = vld [vmem:[#allocation2 + $0x4a] sm:$0x1]
    %v162 = vld [vmem:[#allocation2 + $0x4b] sm:$0x1]
    %vm163 = vcmask 261120
    %v164 = vsel %vm163, %v159, 0.0
    %165 = vadd.xlane.f32.xlu0 %v164
    %v166 = vpop.xlane.xlu0 %165
    %v167 = vsel %vm163, %v160, 0.0
    %168 = vadd.xlane.f32.xlu0 %v167
    %v169 = vpop.xlane.xlu0 %168
    %v170 = vrcp.pop 32.0
    %v171 = vmul.f32 %v166, %v170
    %v172 = vmul.f32 %v169, %v170
    %v173 = vsub.f32 %v159, %v171
    %v174 = vsub.f32 %v160, %v172
    %v175 = vmul.f32 %v173, %v173
    %v176 = vmul.f32 %v174, %v174
    %v177 = vsel %vm163, %v175, 0.0
    %178 = vadd.xlane.f32.xlu0 %v177
    %v179 = vpop.xlane.xlu0 %178
    %v180 = vsel %vm163, %v176, 0.0
    %181 = vadd.xlane.f32.xlu0 %v180
    %v182 = vpop.xlane.xlu0 %181
    %v183 = vmul.f32 %v179, %v170
    %v184 = vmul.f32 %v182, %v170
    %v185 = vadd.f32 %v183, 1e-12
    %v186 = vadd.f32 %v184, 1e-12
    %v187 = vrsqrt.pop %v185
    %v188 = vrsqrt.pop %v186
    %v189 = vmul.f32 %v173, %v187
    %v190 = vmul.f32 %v174, %v188
    %v191 = vlaneseq
    %v192 = vshrl.u32 %v191, 7
    %v193 = vsub.s32 0, %v192
    %v194 = vrot.slane %v161, %v193
    %v195 = vmul.f32 %v189, %v194
    %v196 = vmul.f32 %v190, %v194
    %v197 = vlaneseq
    %v198 = vshrl.u32 %v197, 7
    %v199 = vsub.s32 0, %v198
    %v200 = vrot.slane %v162, %v199
    %v201 = vadd.f32 %v195, %v200
    %v202 = vadd.f32 %v196, %v200
    %v203 = vld [vmem:[%s1] sm:$0x3]
    %v204 = vcvt.s32.f32 %v203
    %v205 = vsub.f32 1.0, %v204
    %v206 = vmul.f32 %v205, -10000.0
    %v209 = vunpack.c.l.s4 1966171168
    %v210 = vunpack.c.0.s8 %v209
    %v211 = vlaneseq
    %v212 = vshrl.u32 %v211, 7
    %v213 = vsub.s32 %v210, %v212
    %v214 = vrot.slane %v206, %v213
    %v215 = vcombine.high %v214, %v214
    %v217 = vunpack.c.l.s4 1966171168
    %v218 = vunpack.c.0.s8 %v217
    %v219 = vlaneseq
    %v220 = vshrl.u32 %v219, 7
    %v221 = vsub.s32 %v218, %v220
    %v222 = vrot.slane %v214, %v221
    %v224 = vunpack.c.l.s4 1966171168
    %v225 = vunpack.c.0.s8 %v224
    %v226 = vlaneseq
    %v227 = vshrl.u32 %v226, 7
    %v228 = vsub.s32 %v225, %v227
    %v229 = vrot.slane %v215, %v228
    %v230 = vlaneseq
    %v231 = vshrl.u32 %v230, 7
    %v232 = vsub.s32 0, %v231
    %v233 = vrot.slane %v222, %v232
    %v234 = vlaneseq
    %v235 = vshrl.u32 %v234, 7
    %v236 = vsub.s32 0, %v235
    %v237 = vrot.slane %v229, %v236
    %v240 = vld [vmem:[#allocation5] sm:$0xf]
    %v241 = vld [vmem:[#allocation5 + $0x4] sm:$0xf]
    %v242 = vld [vmem:[#allocation5 + $0x8] sm:$0xf]
    %v243 = vld [vmem:[#allocation5 + $0xc] sm:$0xf]
    %v244 = vpack.c.bf16 %v202, %v201
    %v245 = vld [vmem:[#allocation2 + $0x4c] sm:$0x1]
    %v246 = vlaneseq
    %v247 = vshrl.u32 %v246, 7
    %v248 = vsub.s32 0, %v247
    %v249 = vrot.slane %v245, %v248
    %v254 = vunpack.c.l.b16 %v240
    %v255 = vunpack.c.l.b16 %v241
    %v256 = vunpack.c.l.b16 %v242
    %v257 = vunpack.c.l.b16 %v243
    %v258 = vpack.c.b16 %v255, %v254
    %v259 = vpack.c.b16 %v257, %v256
    %v263 = vsel %vm163, %v244, 0
    %265 = vmatprep.subr.bf16.mxu0 0
    %266 = vmatpush1.bf16.msra.mxu0 %v258
    %267 = vmatprep.subr.bf16.mxu0 0
    %268 = vmatpush1.bf16.msra.mxu0 %v259
    %269 = vmatprep.subr.bf16.mxu0 0
    %270 = vmatpush1.bf16.msra.mxu0 0
    %271 = vmatprep.subr.bf16.mxu0 0
    %272 = vmatpush1.bf16.msra.mxu0 0
    %273 = vmatprep.subr.bf16.mxu0 0
    %274 = vmatpush1.bf16.msra.mxu0 0
    %275 = vmatprep.subr.bf16.mxu0 0
    %276 = vmatpush1.bf16.msra.mxu0 0
    %277 = vmatprep.subr.bf16.mxu0 0
    %278 = vmatpush1.bf16.msra.mxu0 0
    %279 = vmatprep.subr.bf16.mxu0 0
    %280 = vmatpush1.bf16.msra.mxu0 0
    %281 = vmatprep.subr.bf16.mxu0 0
    %282 = vmatpush1.bf16.msra.mxu0 0
    %283 = vmatprep.subr.bf16.mxu0 0
    %284 = vmatpush1.bf16.msra.mxu0 0
    %285 = vmatprep.subr.bf16.mxu0 0
    %286 = vmatpush1.bf16.msra.mxu0 0
    %287 = vmatprep.subr.bf16.mxu0 0
    %288 = vmatpush1.bf16.msra.mxu0 0
    %289 = vmatprep.subr.bf16.mxu0 0
    %290 = vmatpush1.bf16.msra.mxu0 0
    %291 = vmatprep.subr.bf16.mxu0 0
    %292 = vmatpush1.bf16.msra.mxu0 0
    %293 = vmatprep.subr.bf16.mxu0 0
    %294 = vmatpush1.bf16.msra.mxu0 0
    %295 = vmatprep.subr.bf16.mxu0 0
    %296 = vmatpush1.bf16.msra.mxu0 0
    %297 = vmatprep.mubr.bf16.mxu0 0
    %298 = vmatmul.mubr.bf16.gmra.mrb[0].mxu0 %v263
    %v299 = vpop.f32.mrb[0].mxu0
    %v300 = vadd.f32 %v249, %v299
    %v301 = vpop.f32.mrb[0].mxu0
    %v302 = vpop.f32.mrb[0].mxu0
    %v303 = vadd.f32 %v249, %v302
    %v304 = vpop.f32.mrb[0].mxu0
    %305 = vdwg.mxu0
    %v306 = vpack.c.bf16 %v303, %v300
    %v308 = vunpack.c.l.b16 %v306
    %v309 = vunpack.c.h.b16 %v306
    %v310 = vpack.c.b16 %v308, %v308
    %v311 = vpack.c.b16 %v309, %v309
    %312 = vrot.lane.b32.xlu0 %v310, 96
    %v313 = vpop.permute.xlu0 %312
    %vm314 = vcmask 130048
    %v316 = vsel %vm314, %v310, 0
    %v319 = vsel %vm314, %v313, 0
    %321 = vmatprep.subr.bf16.mxu0 0
    %322 = vmatpush1.bf16.xpose.msra.mxu0 %v319
    %323 = vmatprep.subr.bf16.mxu0 0
    %324 = vmatpush1.bf16.xpose.msra.mxu0 0
    %325 = vmatprep.subr.bf16.mxu0 0
    %326 = vmatpush1.bf16.xpose.msra.mxu0 0
    %327 = vmatprep.subr.bf16.mxu0 0
    %328 = vmatpush1.bf16.xpose.msra.mxu0 0
    %329 = vmatprep.subr.bf16.mxu0 0
    %330 = vmatpush1.bf16.xpose.msra.mxu0 0
    %331 = vmatprep.subr.bf16.mxu0 0
    %332 = vmatpush1.bf16.xpose.msra.mxu0 0
    %333 = vmatprep.subr.bf16.mxu0 0
    %334 = vmatpush1.bf16.xpose.msra.mxu0 0
    %335 = vmatprep.subr.bf16.mxu0 0
    %336 = vmatpush1.bf16.xpose.msra.mxu0 0
    %337 = vmatprep.subr.bf16.mxu0 0
    %338 = vmatpush1.bf16.xpose.msra.mxu0 0
    %339 = vmatprep.subr.bf16.mxu0 0
    %340 = vmatpush1.bf16.xpose.msra.mxu0 0
    %341 = vmatprep.subr.bf16.mxu0 0
    %342 = vmatpush1.bf16.xpose.msra.mxu0 0
    %343 = vmatprep.subr.bf16.mxu0 0
    %344 = vmatpush1.bf16.xpose.msra.mxu0 0
    %345 = vmatprep.subr.bf16.mxu0 0
    %346 = vmatpush1.bf16.xpose.msra.mxu0 0
    %347 = vmatprep.subr.bf16.mxu0 0
    %348 = vmatpush1.bf16.xpose.msra.mxu0 0
    %349 = vmatprep.subr.bf16.mxu0 0
    %350 = vmatpush1.bf16.xpose.msra.mxu0 0
    %351 = vmatprep.subr.bf16.mxu0 0
    %352 = vmatpush1.bf16.xpose.msra.mxu0 0
    %353 = vmatprep.mubr.bf16.mxu0 0
    %354 = vmatmul.mubr.bf16.gmra.mrb[0].mxu0 %v316
    %v355 = vpop.f32.mrb[0].mxu0
    %v356 = vadd.f32 %v233, %v355
    %v357 = vpop.f32.mrb[0].mxu0
    %v358 = vpop.f32.mrb[0].mxu0
    %v359 = vpop.f32.mrb[0].mxu0
    %360 = vdwg.mxu0
    %361 = vrot.lane.b32.xlu0 %v311, 96
    %v362 = vpop.permute.xlu0 %361
    %v364 = vsel %vm314, %v311, 0
    %v367 = vsel %vm314, %v362, 0
    %369 = vmatprep.subr.bf16.mxu0 0
    %370 = vmatpush1.bf16.xpose.msra.mxu0 %v367
    %371 = vmatprep.subr.bf16.mxu0 0
    %372 = vmatpush1.bf16.xpose.msra.mxu0 0
    %373 = vmatprep.subr.bf16.mxu0 0
    %374 = vmatpush1.bf16.xpose.msra.mxu0 0
    %375 = vmatprep.subr.bf16.mxu0 0
    %376 = vmatpush1.bf16.xpose.msra.mxu0 0
    %377 = vmatprep.subr.bf16.mxu0 0
    %378 = vmatpush1.bf16.xpose.msra.mxu0 0
    %379 = vmatprep.subr.bf16.mxu0 0
    %380 = vmatpush1.bf16.xpose.msra.mxu0 0
    %381 = vmatprep.subr.bf16.mxu0 0
    %382 = vmatpush1.bf16.xpose.msra.mxu0 0
    %383 = vmatprep.subr.bf16.mxu0 0
    %384 = vmatpush1.bf16.xpose.msra.mxu0 0
    %385 = vmatprep.subr.bf16.mxu0 0
    %386 = vmatpush1.bf16.xpose.msra.mxu0 0
    %387 = vmatprep.subr.bf16.mxu0 0
    %388 = vmatpush1.bf16.xpose.msra.mxu0 0
    %389 = vmatprep.subr.bf16.mxu0 0
    %390 = vmatpush1.bf16.xpose.msra.mxu0 0
    %391 = vmatprep.subr.bf16.mxu0 0
    %392 = vmatpush1.bf16.xpose.msra.mxu0 0
    %393 = vmatprep.subr.bf16.mxu0 0
    %394 = vmatpush1.bf16.xpose.msra.mxu0 0
    %395 = vmatprep.subr.bf16.mxu0 0
    %396 = vmatpush1.bf16.xpose.msra.mxu0 0
    %397 = vmatprep.subr.bf16.mxu0 0
    %398 = vmatpush1.bf16.xpose.msra.mxu0 0
    %399 = vmatprep.subr.bf16.mxu0 0
    %400 = vmatpush1.bf16.xpose.msra.mxu0 0
    %401 = vmatprep.mubr.bf16.mxu0 0
    %402 = vmatmul.mubr.bf16.gmra.mrb[0].mxu0 %v364
    %v403 = vpop.f32.mrb[0].mxu0
    %v404 = vadd.f32 %v237, %v403
    %v405 = vpop.f32.mrb[0].mxu0
    %v406 = vpop.f32.mrb[0].mxu0
    %v407 = vpop.f32.mrb[0].mxu0
    %408 = vdwg.mxu0
    %vm409 = vcmask 64512
    %v410 = vsel %vm409, %v356, -inf
    %411 = vmax.xlane.f32.xlu0 %v410
    %v412 = vpop.xlane.xlu0 %411
    %v413 = vsel %vm409, %v404, -inf
    %414 = vmax.xlane.f32.xlu0 %v413
    %v415 = vpop.xlane.xlu0 %414
    %v416 = vsub.f32 %v356, %v412
    %v417 = vsub.f32 %v404, %v415
    %v418 = vmul.f32 %v416, 1.442695
    %v419 = vpow.pop %v418
    %v420 = vmul.f32 %v417, 1.442695
    %v421 = vpow.pop %v420
    %v422 = vsel %vm409, %v419, 0.0
    %423 = vadd.xlane.f32.xlu0 %v422
    %v424 = vpop.xlane.xlu0 %423
    %v425 = vsel %vm409, %v421, 0.0
    %426 = vadd.xlane.f32.xlu0 %v425
    %v427 = vpop.xlane.xlu0 %426
    %v428 = vrcp.pop %v424
    %v429 = vrcp.pop %v427
    %v430 = vmul.f32 %v419, %v428
    %v431 = vmul.f32 %v421, %v429
    %v432 = vpack.c.bf16 %v430, %v430
    %v433 = vpack.c.bf16 %v431, %v431
    %434 = vrot.lane.b32.xlu0 %v310, 64
    %v435 = vpop.permute.xlu0 %434
    %v437 = vsel %vm409, %v432, 0
    %vm439 = vcmask 1043456
    %v441 = vsel %vm439, %v435, 0
    %443 = vmatprep.subr.bf16.mxu0 0
    %444 = vmatpush1.bf16.msra.mxu0 %v441
    %445 = vmatprep.subr.bf16.mxu0 0
    %446 = vmatpush1.bf16.msra.mxu0 0
    %447 = vmatprep.subr.bf16.mxu0 0
    %448 = vmatpush1.bf16.msra.mxu0 0
    %449 = vmatprep.subr.bf16.mxu0 0
    %450 = vmatpush1.bf16.msra.mxu0 0
    %451 = vmatprep.subr.bf16.mxu0 0
    %452 = vmatpush1.bf16.msra.mxu0 0
    %453 = vmatprep.subr.bf16.mxu0 0
    %454 = vmatpush1.bf16.msra.mxu0 0
    %455 = vmatprep.subr.bf16.mxu0 0
    %456 = vmatpush1.bf16.msra.mxu0 0
    %457 = vmatprep.subr.bf16.mxu0 0
    %458 = vmatpush1.bf16.msra.mxu0 0
    %459 = vmatprep.subr.bf16.mxu0 0
    %460 = vmatpush1.bf16.msra.mxu0 0
    %461 = vmatprep.subr.bf16.mxu0 0
    %462 = vmatpush1.bf16.msra.mxu0 0
    %463 = vmatprep.subr.bf16.mxu0 0
    %464 = vmatpush1.bf16.msra.mxu0 0
    %465 = vmatprep.subr.bf16.mxu0 0
    %466 = vmatpush1.bf16.msra.mxu0 0
    %467 = vmatprep.subr.bf16.mxu0 0
    %468 = vmatpush1.bf16.msra.mxu0 0
    %469 = vmatprep.subr.bf16.mxu0 0
    %470 = vmatpush1.bf16.msra.mxu0 0
    %471 = vmatprep.subr.bf16.mxu0 0
    %472 = vmatpush1.bf16.msra.mxu0 0
    %473 = vmatprep.subr.bf16.mxu0 0
    %474 = vmatpush1.bf16.msra.mxu0 0
    %475 = vmatprep.mubr.bf16.mxu0 0
    %476 = vmatmul.mubr.bf16.gmra.mrb[0].mxu0 %v437
    %v477 = vpop.f32.mrb[0].mxu0
    %v478 = vadd.f32 0.0, %v477
    %v479 = vpop.f32.mrb[0].mxu0
    %v480 = vpop.f32.mrb[0].mxu0
    %v481 = vpop.f32.mrb[0].mxu0
    %482 = vdwg.mxu0
    %483 = vrot.lane.b32.xlu0 %v311, 64
    %v484 = vpop.permute.xlu0 %483
    %v486 = vsel %vm409, %v433, 0
    %v489 = vsel %vm439, %v484, 0
    %491 = vmatprep.subr.bf16.mxu0 0
    %492 = vmatpush1.bf16.msra.mxu0 %v489
    %493 = vmatprep.subr.bf16.mxu0 0
    %494 = vmatpush1.bf16.msra.mxu0 0
    %495 = vmatprep.subr.bf16.mxu0 0
    %496 = vmatpush1.bf16.msra.mxu0 0
    %497 = vmatprep.subr.bf16.mxu0 0
    %498 = vmatpush1.bf16.msra.mxu0 0
    %499 = vmatprep.subr.bf16.mxu0 0
    %500 = vmatpush1.bf16.msra.mxu0 0
    %501 = vmatprep.subr.bf16.mxu0 0
    %502 = vmatpush1.bf16.msra.mxu0 0
    %503 = vmatprep.subr.bf16.mxu0 0
    %504 = vmatpush1.bf16.msra.mxu0 0
    %505 = vmatprep.subr.bf16.mxu0 0
    %506 = vmatpush1.bf16.msra.mxu0 0
    %507 = vmatprep.subr.bf16.mxu0 0
    %508 = vmatpush1.bf16.msra.mxu0 0
    %509 = vmatprep.subr.bf16.mxu0 0
    %510 = vmatpush1.bf16.msra.mxu0 0
    %511 = vmatprep.subr.bf16.mxu0 0
    %512 = vmatpush1.bf16.msra.mxu0 0
    %513 = vmatprep.subr.bf16.mxu0 0
    %514 = vmatpush1.bf16.msra.mxu0 0
    %515 = vmatprep.subr.bf16.mxu0 0
    %516 = vmatpush1.bf16.msra.mxu0 0
    %517 = vmatprep.subr.bf16.mxu0 0
    %518 = vmatpush1.bf16.msra.mxu0 0
    %519 = vmatprep.subr.bf16.mxu0 0
    %520 = vmatpush1.bf16.msra.mxu0 0
    %521 = vmatprep.subr.bf16.mxu0 0
    %522 = vmatpush1.bf16.msra.mxu0 0
    %523 = vmatprep.mubr.bf16.mxu0 0
    %524 = vmatmul.mubr.bf16.gmra.mrb[0].mxu0 %v486
    %v525 = vpop.f32.mrb[0].mxu0
    %v526 = vadd.f32 0.0, %v525
    %v527 = vpop.f32.mrb[0].mxu0
    %v528 = vpop.f32.mrb[0].mxu0
    %v529 = vpop.f32.mrb[0].mxu0
    %530 = vdwg.mxu0
    %v531 = vld [vmem:[#allocation5 + $0x10] sm:$0xf]
    %v532 = vld [vmem:[#allocation5 + $0x14] sm:$0xf]
    %v533 = vpack.c.bf16 %v526, %v478
    %534 = vrot.lane.b32.xlu0 %v310, 112
    %v535 = vpop.permute.xlu0 %534
    %536 = vrot.lane.b32.xlu0 %v310, 80
    %v537 = vpop.permute.xlu0 %536
    %v539 = vsel %vm314, %v535, 0
    %v542 = vsel %vm314, %v537, 0
    %544 = vmatprep.subr.bf16.mxu0 0
    %545 = vmatpush1.bf16.xpose.msra.mxu0 %v542
    %546 = vmatprep.subr.bf16.mxu0 0
    %547 = vmatpush1.bf16.xpose.msra.mxu0 0
    %548 = vmatprep.subr.bf16.mxu0 0
    %549 = vmatpush1.bf16.xpose.msra.mxu0 0
    %550 = vmatprep.subr.bf16.mxu0 0
    %551 = vmatpush1.bf16.xpose.msra.mxu0 0
    %552 = vmatprep.subr.bf16.mxu0 0
    %553 = vmatpush1.bf16.xpose.msra.mxu0 0
    %554 = vmatprep.subr.bf16.mxu0 0
    %555 = vmatpush1.bf16.xpose.msra.mxu0 0
    %556 = vmatprep.subr.bf16.mxu0 0
    %557 = vmatpush1.bf16.xpose.msra.mxu0 0
    %558 = vmatprep.subr.bf16.mxu0 0
    %559 = vmatpush1.bf16.xpose.msra.mxu0 0
    %560 = vmatprep.subr.bf16.mxu0 0
    %561 = vmatpush1.bf16.xpose.msra.mxu0 0
    %562 = vmatprep.subr.bf16.mxu0 0
    %563 = vmatpush1.bf16.xpose.msra.mxu0 0
    %564 = vmatprep.subr.bf16.mxu0 0
    %565 = vmatpush1.bf16.xpose.msra.mxu0 0
    %566 = vmatprep.subr.bf16.mxu0 0
    %567 = vmatpush1.bf16.xpose.msra.mxu0 0
    %568 = vmatprep.subr.bf16.mxu0 0
    %569 = vmatpush1.bf16.xpose.msra.mxu0 0
    %570 = vmatprep.subr.bf16.mxu0 0
    %571 = vmatpush1.bf16.xpose.msra.mxu0 0
    %572 = vmatprep.subr.bf16.mxu0 0
    %573 = vmatpush1.bf16.xpose.msra.mxu0 0
    %574 = vmatprep.subr.bf16.mxu0 0
    %575 = vmatpush1.bf16.xpose.msra.mxu0 0
    %576 = vmatprep.mubr.bf16.mxu0 0
    %577 = vmatmul.mubr.bf16.gmra.mrb[0].mxu0 %v539
    %v578 = vpop.f32.mrb[0].mxu0
    %v579 = vadd.f32 %v233, %v578
    %v580 = vpop.f32.mrb[0].mxu0
    %v581 = vpop.f32.mrb[0].mxu0
    %v582 = vpop.f32.mrb[0].mxu0
    %583 = vdwg.mxu0
    %584 = vrot.lane.b32.xlu0 %v311, 112
    %v585 = vpop.permute.xlu0 %584
    %586 = vrot.lane.b32.xlu0 %v311, 80
    %v587 = vpop.permute.xlu0 %586
    %v589 = vsel %vm314, %v585, 0
    %v592 = vsel %vm314, %v587, 0
    %594 = vmatprep.subr.bf16.mxu0 0
    %595 = vmatpush1.bf16.xpose.msra.mxu0 %v592
    %596 = vmatprep.subr.bf16.mxu0 0
    %597 = vmatpush1.bf16.xpose.msra.mxu0 0
    %598 = vmatprep.subr.bf16.mxu0 0
    %599 = vmatpush1.bf16.xpose.msra.mxu0 0
    %600 = vmatprep.subr.bf16.mxu0 0
    %601 = vmatpush1.bf16.xpose.msra.mxu0 0
    %602 = vmatprep.subr.bf16.mxu0 0
    %603 = vmatpush1.bf16.xpose.msra.mxu0 0
    %604 = vmatprep.subr.bf16.mxu0 0
    %605 = vmatpush1.bf16.xpose.msra.mxu0 0
    %606 = vmatprep.subr.bf16.mxu0 0
    %607 = vmatpush1.bf16.xpose.msra.mxu0 0
    %608 = vmatprep.subr.bf16.mxu0 0
    %609 = vmatpush1.bf16.xpose.msra.mxu0 0
    %610 = vmatprep.subr.bf16.mxu0 0
    %611 = vmatpush1.bf16.xpose.msra.mxu0 0
    %612 = vmatprep.subr.bf16.mxu0 0
    %613 = vmatpush1.bf16.xpose.msra.mxu0 0
    %614 = vmatprep.subr.bf16.mxu0 0
    %615 = vmatpush1.bf16.xpose.msra.mxu0 0
    %616 = vmatprep.subr.bf16.mxu0 0
    %617 = vmatpush1.bf16.xpose.msra.mxu0 0
    %618 = vmatprep.subr.bf16.mxu0 0
    %619 = vmatpush1.bf16.xpose.msra.mxu0 0
    %620 = vmatprep.subr.bf16.mxu0 0
    %621 = vmatpush1.bf16.xpose.msra.mxu0 0
    %622 = vmatprep.subr.bf16.mxu0 0
    %623 = vmatpush1.bf16.xpose.msra.mxu0 0
    %624 = vmatprep.subr.bf16.mxu0 0
    %625 = vmatpush1.bf16.xpose.msra.mxu0 0
    %626 = vmatprep.mubr.bf16.mxu0 0
    %627 = vmatmul.mubr.bf16.gmra.mrb[0].mxu0 %v589
    %v628 = vpop.f32.mrb[0].mxu0
    %v629 = vadd.f32 %v237, %v628
    %v630 = vpop.f32.mrb[0].mxu0
    %v631 = vpop.f32.mrb[0].mxu0
    %v632 = vpop.f32.mrb[0].mxu0
    %633 = vdwg.mxu0
    %v634 = vsel %vm409, %v579, -inf
    %635 = vmax.xlane.f32.xlu0 %v634
    %v636 = vpop.xlane.xlu0 %635
    %v637 = vsel %vm409, %v629, -inf
    %638 = vmax.xlane.f32.xlu0 %v637
    %v639 = vpop.xlane.xlu0 %638
    %v640 = vsub.f32 %v579, %v636
    %v641 = vsub.f32 %v629, %v639
    %v642 = vmul.f32 %v640, 1.442695
    %v643 = vpow.pop %v642
    %v644 = vmul.f32 %v641, 1.442695
    %v645 = vpow.pop %v644
    %v646 = vsel %vm409, %v643, 0.0
    %647 = vadd.xlane.f32.xlu0 %v646
    %v648 = vpop.xlane.xlu0 %647
    %v649 = vsel %vm409, %v645, 0.0
    %650 = vadd.xlane.f32.xlu0 %v649
    %v651 = vpop.xlane.xlu0 %650
    %v652 = vrcp.pop %v648
    %v653 = vrcp.pop %v651
    %v654 = vmul.f32 %v643, %v652
    %v655 = vmul.f32 %v645, %v653
    %v656 = vpack.c.bf16 %v654, %v654
    %v657 = vpack.c.bf16 %v655, %v655
    %658 = vrot.lane.b32.xlu0 %v310, 48
    %v659 = vpop.permute.xlu0 %658
    %v661 = vsel %vm409, %v656, 0
    %v664 = vsel %vm439, %v659, 0
    %666 = vmatprep.subr.bf16.mxu0 0
    %667 = vmatpush1.bf16.msra.mxu0 %v664
    %668 = vmatprep.subr.bf16.mxu0 0
    %669 = vmatpush1.bf16.msra.mxu0 0
    %670 = vmatprep.subr.bf16.mxu0 0
    %671 = vmatpush1.bf16.msra.mxu0 0
    %672 = vmatprep.subr.bf16.mxu0 0
    %673 = vmatpush1.bf16.msra.mxu0 0
    %674 = vmatprep.subr.bf16.mxu0 0
    %675 = vmatpush1.bf16.msra.mxu0 0
    %676 = vmatprep.subr.bf16.mxu0 0
    %677 = vmatpush1.bf16.msra.mxu0 0
    %678 = vmatprep.subr.bf16.mxu0 0
    %679 = vmatpush1.bf16.msra.mxu0 0
    %680 = vmatprep.subr.bf16.mxu0 0
    %681 = vmatpush1.bf16.msra.mxu0 0
    %682 = vmatprep.subr.bf16.mxu0 0
    %683 = vmatpush1.bf16.msra.mxu0 0
    %684 = vmatprep.subr.bf16.mxu0 0
    %685 = vmatpush1.bf16.msra.mxu0 0
    %686 = vmatprep.subr.bf16.mxu0 0
    %687 = vmatpush1.bf16.msra.mxu0 0
    %688 = vmatprep.subr.bf16.mxu0 0
    %689 = vmatpush1.bf16.msra.mxu0 0
    %690 = vmatprep.subr.bf16.mxu0 0
    %691 = vmatpush1.bf16.msra.mxu0 0
    %692 = vmatprep.subr.bf16.mxu0 0
    %693 = vmatpush1.bf16.msra.mxu0 0
    %694 = vmatprep.subr.bf16.mxu0 0
    %695 = vmatpush1.bf16.msra.mxu0 0
    %696 = vmatprep.subr.bf16.mxu0 0
    %697 = vmatpush1.bf16.msra.mxu0 0
    %698 = vmatprep.mubr.bf16.mxu0 0
    %699 = vmatmul.mubr.bf16.gmra.mrb[0].mxu0 %v661
    %v700 = vpop.f32.mrb[0].mxu0
    %v701 = vadd.f32 0.0, %v700
    %v702 = vpop.f32.mrb[0].mxu0
    %v703 = vpop.f32.mrb[0].mxu0
    %v704 = vpop.f32.mrb[0].mxu0
    %705 = vdwg.mxu0
    %706 = vrot.lane.b32.xlu0 %v311, 48
    %v707 = vpop.permute.xlu0 %706
    %v709 = vsel %vm409, %v657, 0
    %v712 = vsel %vm439, %v707, 0
    %714 = vmatprep.subr.bf16.mxu0 0
    %715 = vmatpush1.bf16.msra.mxu0 %v712
    %716 = vmatprep.subr.bf16.mxu0 0
    %717 = vmatpush1.bf16.msra.mxu0 0
    %718 = vmatprep.subr.bf16.mxu0 0
    %719 = vmatpush1.bf16.msra.mxu0 0
    %720 = vmatprep.subr.bf16.mxu0 0
    %721 = vmatpush1.bf16.msra.mxu0 0
    %722 = vmatprep.subr.bf16.mxu0 0
    %723 = vmatpush1.bf16.msra.mxu0 0
    %724 = vmatprep.subr.bf16.mxu0 0
    %725 = vmatpush1.bf16.msra.mxu0 0
    %726 = vmatprep.subr.bf16.mxu0 0
    %727 = vmatpush1.bf16.msra.mxu0 0
    %728 = vmatprep.subr.bf16.mxu0 0
    %729 = vmatpush1.bf16.msra.mxu0 0
    %730 = vmatprep.subr.bf16.mxu0 0
    %731 = vmatpush1.bf16.msra.mxu0 0
    %732 = vmatprep.subr.bf16.mxu0 0
    %733 = vmatpush1.bf16.msra.mxu0 0
    %734 = vmatprep.subr.bf16.mxu0 0
    %735 = vmatpush1.bf16.msra.mxu0 0
    %736 = vmatprep.subr.bf16.mxu0 0
    %737 = vmatpush1.bf16.msra.mxu0 0
    %738 = vmatprep.subr.bf16.mxu0 0
    %739 = vmatpush1.bf16.msra.mxu0 0
    %740 = vmatprep.subr.bf16.mxu0 0
    %741 = vmatpush1.bf16.msra.mxu0 0
    %742 = vmatprep.subr.bf16.mxu0 0
    %743 = vmatpush1.bf16.msra.mxu0 0
    %744 = vmatprep.subr.bf16.mxu0 0
    %745 = vmatpush1.bf16.msra.mxu0 0
    %746 = vmatprep.mubr.bf16.mxu0 0
    %747 = vmatmul.mubr.bf16.gmra.mrb[0].mxu0 %v709
    %v748 = vpop.f32.mrb[0].mxu0
    %v749 = vadd.f32 0.0, %v748
    %v750 = vpop.f32.mrb[0].mxu0
    %v751 = vpop.f32.mrb[0].mxu0
    %v752 = vpop.f32.mrb[0].mxu0
    %753 = vdwg.mxu0
    %v754 = vld [vmem:[#allocation5 + $0x18] sm:$0xf]
    %v755 = vld [vmem:[#allocation5 + $0x1c] sm:$0xf]
    %v756 = vpack.c.bf16 %v749, %v701
    %v759 = vunpack.c.l.b16 %v754
    %v760 = vunpack.c.l.b16 %v755
    %v761 = vpack.c.b16 %v760, %v759
    %v764 = vsel %vm314, %v756, 0
    %766 = vmatprep.subr.bf16.mxu0 0
    %767 = vmatpush1.bf16.msra.mxu0 %v761
    %768 = vmatprep.subr.bf16.mxu0 0
    %769 = vmatpush1.bf16.msra.mxu0 0
    %770 = vmatprep.subr.bf16.mxu0 0
    %771 = vmatpush1.bf16.msra.mxu0 0
    %772 = vmatprep.subr.bf16.mxu0 0
    %773 = vmatpush1.bf16.msra.mxu0 0
    %774 = vmatprep.subr.bf16.mxu0 0
    %775 = vmatpush1.bf16.msra.mxu0 0
    %776 = vmatprep.subr.bf16.mxu0 0
    %777 = vmatpush1.bf16.msra.mxu0 0
    %778 = vmatprep.subr.bf16.mxu0 0
    %779 = vmatpush1.bf16.msra.mxu0 0
    %780 = vmatprep.subr.bf16.mxu0 0
    %781 = vmatpush1.bf16.msra.mxu0 0
    %782 = vmatprep.subr.bf16.mxu0 0
    %783 = vmatpush1.bf16.msra.mxu0 0
    %784 = vmatprep.subr.bf16.mxu0 0
    %785 = vmatpush1.bf16.msra.mxu0 0
    %786 = vmatprep.subr.bf16.mxu0 0
    %787 = vmatpush1.bf16.msra.mxu0 0
    %788 = vmatprep.subr.bf16.mxu0 0
    %789 = vmatpush1.bf16.msra.mxu0 0
    %790 = vmatprep.subr.bf16.mxu0 0
    %791 = vmatpush1.bf16.msra.mxu0 0
    %792 = vmatprep.subr.bf16.mxu0 0
    %793 = vmatpush1.bf16.msra.mxu0 0
    %794 = vmatprep.subr.bf16.mxu0 0
    %795 = vmatpush1.bf16.msra.mxu0 0
    %796 = vmatprep.subr.bf16.mxu0 0
    %797 = vmatpush1.bf16.msra.mxu0 0
    %798 = vmatprep.mubr.bf16.mxu0 0
    %799 = vmatmul.mubr.bf16.gmra.mrb[0].mxu0 %v764
    %v800 = vpop.f32.mrb[0].mxu0
    %v801 = vadd.f32 0.0, %v800
    %v802 = vpop.f32.mrb[0].mxu0
    %v803 = vpop.f32.mrb[0].mxu0
    %v804 = vadd.f32 0.0, %v803
    %v805 = vpop.f32.mrb[0].mxu0
    %806 = vdwg.mxu0
    %v809 = vunpack.c.l.b16 %v531
    %v810 = vunpack.c.l.b16 %v532
    %v811 = vpack.c.b16 %v810, %v809
    %v814 = vsel %vm314, %v533, 0
    %816 = vmatprep.subr.bf16.mxu0 0
    %817 = vmatpush1.bf16.msra.mxu0 %v811
    %818 = vmatprep.subr.bf16.mxu0 0
    %819 = vmatpush1.bf16.msra.mxu0 0
    %820 = vmatprep.subr.bf16.mxu0 0
    %821 = vmatpush1.bf16.msra.mxu0 0
    %822 = vmatprep.subr.bf16.mxu0 0
    %823 = vmatpush1.bf16.msra.mxu0 0
    %824 = vmatprep.subr.bf16.mxu0 0
    %825 = vmatpush1.bf16.msra.mxu0 0
    %826 = vmatprep.subr.bf16.mxu0 0
    %827 = vmatpush1.bf16.msra.mxu0 0
    %828 = vmatprep.subr.bf16.mxu0 0
    %829 = vmatpush1.bf16.msra.mxu0 0
    %830 = vmatprep.subr.bf16.mxu0 0
    %831 = vmatpush1.bf16.msra.mxu0 0
    %832 = vmatprep.subr.bf16.mxu0 0
    %833 = vmatpush1.bf16.msra.mxu0 0
    %834 = vmatprep.subr.bf16.mxu0 0
    %835 = vmatpush1.bf16.msra.mxu0 0
    %836 = vmatprep.subr.bf16.mxu0 0
    %837 = vmatpush1.bf16.msra.mxu0 0
    %838 = vmatprep.subr.bf16.mxu0 0
    %839 = vmatpush1.bf16.msra.mxu0 0
    %840 = vmatprep.subr.bf16.mxu0 0
    %841 = vmatpush1.bf16.msra.mxu0 0
    %842 = vmatprep.subr.bf16.mxu0 0
    %843 = vmatpush1.bf16.msra.mxu0 0
    %844 = vmatprep.subr.bf16.mxu0 0
    %845 = vmatpush1.bf16.msra.mxu0 0
    %846 = vmatprep.subr.bf16.mxu0 0
    %847 = vmatpush1.bf16.msra.mxu0 0
    %848 = vmatprep.mubr.bf16.mxu0 0
    %849 = vmatmul.mubr.bf16.gmra.mrb[0].mxu0 %v814
    %v850 = vpop.f32.mrb[0].mxu0
    %v851 = vadd.f32 %v801, %v850
    %v852 = vpop.f32.mrb[0].mxu0
    %v853 = vpop.f32.mrb[0].mxu0
    %v854 = vadd.f32 %v804, %v853
    %v855 = vpop.f32.mrb[0].mxu0
    %856 = vdwg.mxu0
    %v857 = vadd.f32 %v201, %v851
    %v858 = vadd.f32 %v202, %v854
    %v859 = vld [vmem:[#allocation2 + $0x4d] sm:$0x1]
    %v860 = vlaneseq
    %v861 = vshrl.u32 %v860, 7
    %v862 = vsub.s32 0, %v861
    %v863 = vrot.slane %v859, %v862
    %v864 = vadd.f32 %v857, %v863
    %v865 = vadd.f32 %v858, %v863
    %v866 = vld [vmem:[#allocation2 + $0x4e] sm:$0x1]
    %v867 = vld [vmem:[#allocation2 + $0x4f] sm:$0x1]
    %v868 = vsel %vm163, %v864, 0.0
    %869 = vadd.xlane.f32.xlu0 %v868
    %v870 = vpop.xlane.xlu0 %869
    %v871 = vsel %vm163, %v865, 0.0
    %872 = vadd.xlane.f32.xlu0 %v871
    %v873 = vpop.xlane.xlu0 %872
    %v874 = vmul.f32 %v870, %v170
    %v875 = vmul.f32 %v873, %v170
    %v876 = vsub.f32 %v864, %v874
    %v877 = vsub.f32 %v865, %v875
    %v878 = vmul.f32 %v876, %v876
    %v879 = vmul.f32 %v877, %v877
    %v880 = vsel %vm163, %v878, 0.0
    %881 = vadd.xlane.f32.xlu0 %v880
    %v882 = vpop.xlane.xlu0 %881
    %v883 = vsel %vm163, %v879, 0.0
    %884 = vadd.xlane.f32.xlu0 %v883
    %v885 = vpop.xlane.xlu0 %884
    %v886 = vmul.f32 %v882, %v170
    %v887 = vmul.f32 %v885, %v170
    %v888 = vadd.f32 %v886, 1e-12
    %v889 = vadd.f32 %v887, 1e-12
    %v890 = vrsqrt.pop %v888
    %v891 = vrsqrt.pop %v889
    %v892 = vmul.f32 %v876, %v890
    %v893 = vmul.f32 %v877, %v891
    %v894 = vlaneseq
    %v895 = vshrl.u32 %v894, 7
    %v896 = vsub.s32 0, %v895
    %v897 = vrot.slane %v866, %v896
    %v898 = vmul.f32 %v892, %v897
    %v899 = vmul.f32 %v893, %v897
    %v900 = vlaneseq
    %v901 = vshrl.u32 %v900, 7
    %v902 = vsub.s32 0, %v901
    %v903 = vrot.slane %v867, %v902
    %v904 = vadd.f32 %v898, %v903
    %v905 = vadd.f32 %v899, %v903
    %v906 = vld [vmem:[#allocation5 + $0x20] sm:$0xf]
    %v907 = vld [vmem:[#allocation5 + $0x24] sm:$0xf]
    %v908 = vld [vmem:[#allocation5 + $0x28] sm:$0xf]
    %v909 = vld [vmem:[#allocation5 + $0x2c] sm:$0xf]
    %v910 = vpack.c.bf16 %v905, %v904
    %v911 = vld [vmem:[#allocation2 + $0x50] sm:$0x1]
    %v912 = vlaneseq
    %v913 = vshrl.u32 %v912, 7
    %v914 = vsub.s32 0, %v913
    %v915 = vrot.slane %v911, %v914
    %v920 = vunpack.c.l.b16 %v906
    %v921 = vunpack.c.l.b16 %v907
    %v922 = vunpack.c.l.b16 %v908
    %v923 = vunpack.c.l.b16 %v909
    %v924 = vpack.c.b16 %v921, %v920
    %v925 = vpack.c.b16 %v923, %v922
    %v929 = vsel %vm163, %v910, 0
    %931 = vmatprep.subr.bf16.mxu0 0
    %932 = vmatpush1.bf16.msra.mxu0 %v924
    %933 = vmatprep.subr.bf16.mxu0 0
    %934 = vmatpush1.bf16.msra.mxu0 %v925
    %935 = vmatprep.subr.bf16.mxu0 0
    %936 = vmatpush1.bf16.msra.mxu0 0
    %937 = vmatprep.subr.bf16.mxu0 0
    %938 = vmatpush1.bf16.msra.mxu0 0
    %939 = vmatprep.subr.bf16.mxu0 0
    %940 = vmatpush1.bf16.msra.mxu0 0
    %941 = vmatprep.subr.bf16.mxu0 0
    %942 = vmatpush1.bf16.msra.mxu0 0
    %943 = vmatprep.subr.bf16.mxu0 0
    %944 = vmatpush1.bf16.msra.mxu0 0
    %945 = vmatprep.subr.bf16.mxu0 0
    %946 = vmatpush1.bf16.msra.mxu0 0
    %947 = vmatprep.subr.bf16.mxu0 0
    %948 = vmatpush1.bf16.msra.mxu0 0
    %949 = vmatprep.subr.bf16.mxu0 0
    %950 = vmatpush1.bf16.msra.mxu0 0
    %951 = vmatprep.subr.bf16.mxu0 0
    %952 = vmatpush1.bf16.msra.mxu0 0
    %953 = vmatprep.subr.bf16.mxu0 0
    %954 = vmatpush1.bf16.msra.mxu0 0
    %955 = vmatprep.subr.bf16.mxu0 0
    %956 = vmatpush1.bf16.msra.mxu0 0
    %957 = vmatprep.subr.bf16.mxu0 0
    %958 = vmatpush1.bf16.msra.mxu0 0
    %959 = vmatprep.subr.bf16.mxu0 0
    %960 = vmatpush1.bf16.msra.mxu0 0
    %961 = vmatprep.subr.bf16.mxu0 0
    %962 = vmatpush1.bf16.msra.mxu0 0
    %963 = vmatprep.mubr.bf16.mxu0 0
    %964 = vmatmul.mubr.bf16.gmra.mrb[0].mxu0 %v929
    %v965 = vpop.f32.mrb[0].mxu0
    %v966 = vadd.f32 %v915, %v965
    %v967 = vpop.f32.mrb[0].mxu0
    %v968 = vpop.f32.mrb[0].mxu0
    %v969 = vadd.f32 %v915, %v968
    %v970 = vpop.f32.mrb[0].mxu0
    %971 = vdwg.mxu0
    %v972 = vmul.f32 %v966, 0.5
    %v973 = vmul.f32 %v969, 0.5
    %v974 = vmul.f32 %v966, 0.044715
    %v975 = vmul.f32 %v969, 0.044715
    %v976 = vmul.f32 %v974, %v966
    %v977 = vmul.f32 %v975, %v969
    %v978 = vmul.f32 %v976, %v966
    %v979 = vmul.f32 %v977, %v969
    %v980 = vadd.f32 %v966, %v978
    %v981 = vadd.f32 %v969, %v979
    %v982 = vmul.f32 %v980, 0.7978846
    %v983 = vmul.f32 %v981, 0.7978846
    %v984 = vtanh.pop %v982
    %v985 = vtanh.pop %v983
    %v986 = vadd.f32 %v984, 1.0
    %v987 = vadd.f32 %v985, 1.0
    %v988 = vmul.f32 %v972, %v986
    %v989 = vmul.f32 %v973, %v987
    %v990 = vld [vmem:[#allocation5 + $0x30] sm:$0xf]
    %v991 = vld [vmem:[#allocation5 + $0x34] sm:$0xf]
    %v992 = vld [vmem:[#allocation5 + $0x38] sm:$0xf]
    %v993 = vld [vmem:[#allocation5 + $0x3c] sm:$0xf]
    %v994 = vld [vmem:[#allocation5 + $0x40] sm:$0xf]
    %v995 = vld [vmem:[#allocation5 + $0x44] sm:$0xf]
    %v996 = vld [vmem:[#allocation5 + $0x48] sm:$0xf]
    %v997 = vld [vmem:[#allocation5 + $0x4c] sm:$0xf]
    %v998 = vpack.c.bf16 %v989, %v988
    %v999 = vld [vmem:[#allocation2 + $0x51] sm:$0x1]
    %v1000 = vlaneseq
    %v1001 = vshrl.u32 %v1000, 7
    %v1002 = vsub.s32 0, %v1001
    %v1003 = vrot.slane %v999, %v1002
    %v1012 = vunpack.c.l.b16 %v990
    %v1013 = vunpack.c.l.b16 %v991
    %v1014 = vunpack.c.l.b16 %v992
    %v1015 = vunpack.c.l.b16 %v993
    %v1016 = vunpack.c.l.b16 %v994
    %v1017 = vunpack.c.l.b16 %v995
    %v1018 = vunpack.c.l.b16 %v996
    %v1019 = vunpack.c.l.b16 %v997
    %v1020 = vpack.c.b16 %v1013, %v1012
    %v1021 = vpack.c.b16 %v1015, %v1014
    %v1022 = vpack.c.b16 %v1017, %v1016
    %v1023 = vpack.c.b16 %v1019, %v1018
    %vm1028 = vcmask 523264
    %v1030 = vsel %vm1028, %v998, 0
    %1032 = vmatprep.subr.bf16.mxu0 0
    %1033 = vmatpush1.bf16.msra.mxu0 %v1020
    %1034 = vmatprep.subr.bf16.mxu0 0
    %1035 = vmatpush1.bf16.msra.mxu0 %v1021
    %1036 = vmatprep.subr.bf16.mxu0 0
    %1037 = vmatpush1.bf16.msra.mxu0 %v1022
    %1038 = vmatprep.subr.bf16.mxu0 0
    %1039 = vmatpush1.bf16.msra.mxu0 %v1023
    %1040 = vmatprep.subr.bf16.mxu0 0
    %1041 = vmatpush1.bf16.msra.mxu0 0
    %1042 = vmatprep.subr.bf16.mxu0 0
    %1043 = vmatpush1.bf16.msra.mxu0 0
    %1044 = vmatprep.subr.bf16.mxu0 0
    %1045 = vmatpush1.bf16.msra.mxu0 0
    %1046 = vmatprep.subr.bf16.mxu0 0
    %1047 = vmatpush1.bf16.msra.mxu0 0
    %1048 = vmatprep.subr.bf16.mxu0 0
    %1049 = vmatpush1.bf16.msra.mxu0 0
    %1050 = vmatprep.subr.bf16.mxu0 0
    %1051 = vmatpush1.bf16.msra.mxu0 0
    %1052 = vmatprep.subr.bf16.mxu0 0
    %1053 = vmatpush1.bf16.msra.mxu0 0
    %1054 = vmatprep.subr.bf16.mxu0 0
    %1055 = vmatpush1.bf16.msra.mxu0 0
    %1056 = vmatprep.subr.bf16.mxu0 0
    %1057 = vmatpush1.bf16.msra.mxu0 0
    %1058 = vmatprep.subr.bf16.mxu0 0
    %1059 = vmatpush1.bf16.msra.mxu0 0
    %1060 = vmatprep.subr.bf16.mxu0 0
    %1061 = vmatpush1.bf16.msra.mxu0 0
    %1062 = vmatprep.subr.bf16.mxu0 0
    %1063 = vmatpush1.bf16.msra.mxu0 0
    %1064 = vmatprep.mubr.bf16.mxu0 0
    %1065 = vmatmul.mubr.bf16.gmra.mrb[0].mxu0 %v1030
    %v1066 = vpop.f32.mrb[0].mxu0
    %v1067 = vadd.f32 %v1003, %v1066
    %v1068 = vpop.f32.mrb[0].mxu0
    %v1069 = vpop.f32.mrb[0].mxu0
    %v1070 = vadd.f32 %v1003, %v1069
    %v1071 = vpop.f32.mrb[0].mxu0
    %1072 = vdwg.mxu0
    %v1073 = vadd.f32 %v904, %v1067
    %v1074 = vadd.f32 %v905, %v1070
    %v1075 = vld [vmem:[#allocation2 + $0x52] sm:$0x1]
    %v1076 = vld [vmem:[#allocation2 + $0x53] sm:$0x1]
    %v1077 = vsel %vm163, %v1073, 0.0
    %1078 = vadd.xlane.f32.xlu0 %v1077
    %v1079 = vpop.xlane.xlu0 %1078
    %v1080 = vsel %vm163, %v1074, 0.0
    %1081 = vadd.xlane.f32.xlu0 %v1080
    %v1082 = vpop.xlane.xlu0 %1081
    %v1083 = vmul.f32 %v1079, %v170
    %v1084 = vmul.f32 %v1082, %v170
    %v1085 = vsub.f32 %v1073, %v1083
    %v1086 = vsub.f32 %v1074, %v1084
    %v1087 = vmul.f32 %v1085, %v1085
    %v1088 = vmul.f32 %v1086, %v1086
    %v1089 = vsel %vm163, %v1087, 0.0
    %1090 = vadd.xlane.f32.xlu0 %v1089
    %v1091 = vpop.xlane.xlu0 %1090
    %v1092 = vsel %vm163, %v1088, 0.0
    %1093 = vadd.xlane.f32.xlu0 %v1092
    %v1094 = vpop.xlane.xlu0 %1093
    %v1095 = vmul.f32 %v1091, %v170
    %v1096 = vmul.f32 %v1094, %v170
    %v1097 = vadd.f32 %v1095, 1e-12
    %v1098 = vadd.f32 %v1096, 1e-12
    %v1099 = vrsqrt.pop %v1097
    %v1100 = vrsqrt.pop %v1098
    %v1101 = vmul.f32 %v1085, %v1099
    %v1102 = vmul.f32 %v1086, %v1100
    %v1103 = vlaneseq
    %v1104 = vshrl.u32 %v1103, 7
    %v1105 = vsub.s32 0, %v1104
    %v1106 = vrot.slane %v1075, %v1105
    %v1107 = vmul.f32 %v1101, %v1106
    %v1108 = vmul.f32 %v1102, %v1106
    %v1109 = vlaneseq
    %v1110 = vshrl.u32 %v1109, 7
    %v1111 = vsub.s32 0, %v1110
    %v1112 = vrot.slane %v1076, %v1111
    %v1113 = vadd.f32 %v1107, %v1112
    %v1114 = vadd.f32 %v1108, %v1112
    %v1115 = vld [vmem:[#allocation5 + $0x50] sm:$0xf]
    %v1116 = vld [vmem:[#allocation5 + $0x54] sm:$0xf]
    %v1117 = vld [vmem:[#allocation5 + $0x58] sm:$0xf]
    %v1118 = vld [vmem:[#allocation5 + $0x5c] sm:$0xf]
    %v1119 = vpack.c.bf16 %v1114, %v1113
    %v1120 = vld [vmem:[#allocation2 + $0x54] sm:$0x1]
    %v1121 = vlaneseq
    %v1122 = vshrl.u32 %v1121, 7
    %v1123 = vsub.s32 0, %v1122
    %v1124 = vrot.slane %v1120, %v1123
    %v1129 = vunpack.c.l.b16 %v1115
    %v1130 = vunpack.c.l.b16 %v1116
    %v1131 = vunpack.c.l.b16 %v1117
    %v1132 = vunpack.c.l.b16 %v1118
    %v1133 = vpack.c.b16 %v1130, %v1129
    %v1134 = vpack.c.b16 %v1132, %v1131
    %v1138 = vsel %vm163, %v1119, 0
    %1140 = vmatprep.subr.bf16.mxu0 0
    %1141 = vmatpush1.bf16.msra.mxu0 %v1133
    %1142 = vmatprep.subr.bf16.mxu0 0
    %1143 = vmatpush1.bf16.msra.mxu0 %v1134
    %1144 = vmatprep.subr.bf16.mxu0 0
    %1145 = vmatpush1.bf16.msra.mxu0 0
    %1146 = vmatprep.subr.bf16.mxu0 0
    %1147 = vmatpush1.bf16.msra.mxu0 0
    %1148 = vmatprep.subr.bf16.mxu0 0
    %1149 = vmatpush1.bf16.msra.mxu0 0
    %1150 = vmatprep.subr.bf16.mxu0 0
    %1151 = vmatpush1.bf16.msra.mxu0 0
    %1152 = vmatprep.subr.bf16.mxu0 0
    %1153 = vmatpush1.bf16.msra.mxu0 0
    %1154 = vmatprep.subr.bf16.mxu0 0
    %1155 = vmatpush1.bf16.msra.mxu0 0
    %1156 = vmatprep.subr.bf16.mxu0 0
    %1157 = vmatpush1.bf16.msra.mxu0 0
    %1158 = vmatprep.subr.bf16.mxu0 0
    %1159 = vmatpush1.bf16.msra.mxu0 0
    %1160 = vmatprep.subr.bf16.mxu0 0
    %1161 = vmatpush1.bf16.msra.mxu0 0
    %1162 = vmatprep.subr.bf16.mxu0 0
    %1163 = vmatpush1.bf16.msra.mxu0 0
    %1164 = vmatprep.subr.bf16.mxu0 0
    %1165 = vmatpush1.bf16.msra.mxu0 0
    %1166 = vmatprep.subr.bf16.mxu0 0
    %1167 = vmatpush1.bf16.msra.mxu0 0
    %1168 = vmatprep.subr.bf16.mxu0 0
    %1169 = vmatpush1.bf16.msra.mxu0 0
    %1170 = vmatprep.subr.bf16.mxu0 0
    %1171 = vmatpush1.bf16.msra.mxu0 0
    %1172 = vmatprep.mubr.bf16.mxu0 0
    %1173 = vmatmul.mubr.bf16.gmra.mrb[0].mxu0 %v1138
    %v1174 = vpop.f32.mrb[0].mxu0
    %v1175 = vadd.f32 %v1124, %v1174
    %v1176 = vpop.f32.mrb[0].mxu0
    %v1177 = vpop.f32.mrb[0].mxu0
    %v1178 = vadd.f32 %v1124, %v1177
    %v1179 = vpop.f32.mrb[0].mxu0
    %1180 = vdwg.mxu0
    %v1181 = vpack.c.bf16 %v1178, %v1175
    %v1183 = vunpack.c.l.b16 %v1181
    %v1184 = vunpack.c.h.b16 %v1181
    %v1185 = vpack.c.b16 %v1183, %v1183
    %v1186 = vpack.c.b16 %v1184, %v1184
    %1187 = vrot.lane.b32.xlu0 %v1185, 96
    %v1188 = vpop.permute.xlu0 %1187
    %v1190 = vsel %vm314, %v1185, 0
    %v1193 = vsel %vm314, %v1188, 0
    %1195 = vmatprep.subr.bf16.mxu0 0
    %1196 = vmatpush1.bf16.xpose.msra.mxu0 %v1193
    %1197 = vmatprep.subr.bf16.mxu0 0
    %1198 = vmatpush1.bf16.xpose.msra.mxu0 0
    %1199 = vmatprep.subr.bf16.mxu0 0
    %1200 = vmatpush1.bf16.xpose.msra.mxu0 0
    %1201 = vmatprep.subr.bf16.mxu0 0
    %1202 = vmatpush1.bf16.xpose.msra.mxu0 0
    %1203 = vmatprep.subr.bf16.mxu0 0
    %1204 = vmatpush1.bf16.xpose.msra.mxu0 0
    %1205 = vmatprep.subr.bf16.mxu0 0
    %1206 = vmatpush1.bf16.xpose.msra.mxu0 0
    %1207 = vmatprep.subr.bf16.mxu0 0
    %1208 = vmatpush1.bf16.xpose.msra.mxu0 0
    %1209 = vmatprep.subr.bf16.mxu0 0
    %1210 = vmatpush1.bf16.xpose.msra.mxu0 0
    %1211 = vmatprep.subr.bf16.mxu0 0
    %1212 = vmatpush1.bf16.xpose.msra.mxu0 0
    %1213 = vmatprep.subr.bf16.mxu0 0
    %1214 = vmatpush1.bf16.xpose.msra.mxu0 0
    %1215 = vmatprep.subr.bf16.mxu0 0
    %1216 = vmatpush1.bf16.xpose.msra.mxu0 0
    %1217 = vmatprep.subr.bf16.mxu0 0
    %1218 = vmatpush1.bf16.xpose.msra.mxu0 0
    %1219 = vmatprep.subr.bf16.mxu0 0
    %1220 = vmatpush1.bf16.xpose.msra.mxu0 0
    %1221 = vmatprep.subr.bf16.mxu0 0
    %1222 = vmatpush1.bf16.xpose.msra.mxu0 0
    %1223 = vmatprep.subr.bf16.mxu0 0
    %1224 = vmatpush1.bf16.xpose.msra.mxu0 0
    %1225 = vmatprep.subr.bf16.mxu0 0
    %1226 = vmatpush1.bf16.xpose.msra.mxu0 0
    %1227 = vmatprep.mubr.bf16.mxu0 0
    %1228 = vmatmul.mubr.bf16.gmra.mrb[0].mxu0 %v1190
    %v1229 = vpop.f32.mrb[0].mxu0
    %v1230 = vadd.f32 %v233, %v1229
    %v1231 = vpop.f32.mrb[0].mxu0
    %v1232 = vpop.f32.mrb[0].mxu0
    %v1233 = vpop.f32.mrb[0].mxu0
    %1234 = vdwg.mxu0
    %1235 = vrot.lane.b32.xlu0 %v1186, 96
    %v1236 = vpop.permute.xlu0 %1235
    %v1238 = vsel %vm314, %v1186, 0
    %v1241 = vsel %vm314, %v1236, 0
    %1243 = vmatprep.subr.bf16.mxu0 0
    %1244 = vmatpush1.bf16.xpose.msra.mxu0 %v1241
    %1245 = vmatprep.subr.bf16.mxu0 0
    %1246 = vmatpush1.bf16.xpose.msra.mxu0 0
    %1247 = vmatprep.subr.bf16.mxu0 0
    %1248 = vmatpush1.bf16.xpose.msra.mxu0 0
    %1249 = vmatprep.subr.bf16.mxu0 0
    %1250 = vmatpush1.bf16.xpose.msra.mxu0 0
    %1251 = vmatprep.subr.bf16.mxu0 0
    %1252 = vmatpush1.bf16.xpose.msra.mxu0 0
    %1253 = vmatprep.subr.bf16.mxu0 0
    %1254 = vmatpush1.bf16.xpose.msra.mxu0 0
    %1255 = vmatprep.subr.bf16.mxu0 0
    %1256 = vmatpush1.bf16.xpose.msra.mxu0 0
    %1257 = vmatprep.subr.bf16.mxu0 0
    %1258 = vmatpush1.bf16.xpose.msra.mxu0 0
    %1259 = vmatprep.subr.bf16.mxu0 0
    %1260 = vmatpush1.bf16.xpose.msra.mxu0 0
    %1261 = vmatprep.subr.bf16.mxu0 0
    %1262 = vmatpush1.bf16.xpose.msra.mxu0 0
    %1263 = vmatprep.subr.bf16.mxu0 0
    %1264 = vmatpush1.bf16.xpose.msra.mxu0 0
    %1265 = vmatprep.subr.bf16.mxu0 0
    %1266 = vmatpush1.bf16.xpose.msra.mxu0 0
    %1267 = vmatprep.subr.bf16.mxu0 0
    %1268 = vmatpush1.bf16.xpose.msra.mxu0 0
    %1269 = vmatprep.subr.bf16.mxu0 0
    %1270 = vmatpush1.bf16.xpose.msra.mxu0 0
    %1271 = vmatprep.subr.bf16.mxu0 0
    %1272 = vmatpush1.bf16.xpose.msra.mxu0 0
    %1273 = vmatprep.subr.bf16.mxu0 0
    %1274 = vmatpush1.bf16.xpose.msra.mxu0 0
    %1275 = vmatprep.mubr.bf16.mxu0 0
    %1276 = vmatmul.mubr.bf16.gmra.mrb[0].mxu0 %v1238
    %v1277 = vpop.f32.mrb[0].mxu0
    %v1278 = vadd.f32 %v237, %v1277
    %v1279 = vpop.f32.mrb[0].mxu0
    %v1280 = vpop.f32.mrb[0].mxu0
    %v1281 = vpop.f32.mrb[0].mxu0
    %1282 = vdwg.mxu0
    %v1283 = vsel %vm409, %v1230, -inf
    %1284 = vmax.xlane.f32.xlu0 %v1283
    %v1285 = vpop.xlane.xlu0 %1284
    %v1286 = vsel %vm409, %v1278, -inf
    %1287 = vmax.xlane.f32.xlu0 %v1286
    %v1288 = vpop.xlane.xlu0 %1287
    %v1289 = vsub.f32 %v1230, %v1285
    %v1290 = vsub.f32 %v1278, %v1288
    %v1291 = vmul.f32 %v1289, 1.442695
    %v1292 = vpow.pop %v1291
    %v1293 = vmul.f32 %v1290, 1.442695
    %v1294 = vpow.pop %v1293
    %v1295 = vsel %vm409, %v1292, 0.0
    %1296 = vadd.xlane.f32.xlu0 %v1295
    %v1297 = vpop.xlane.xlu0 %1296
    %v1298 = vsel %vm409, %v1294, 0.0
    %1299 = vadd.xlane.f32.xlu0 %v1298
    %v1300 = vpop.xlane.xlu0 %1299
    %v1301 = vrcp.pop %v1297
    %v1302 = vrcp.pop %v1300
    %v1303 = vmul.f32 %v1292, %v1301
    %v1304 = vmul.f32 %v1294, %v1302
    %v1305 = vpack.c.bf16 %v1303, %v1303
    %v1306 = vpack.c.bf16 %v1304, %v1304
    %1307 = vrot.lane.b32.xlu0 %v1185, 64
    %v1308 = vpop.permute.xlu0 %1307
    %v1310 = vsel %vm409, %v1305, 0
    %v1313 = vsel %vm439, %v1308, 0
    %1315 = vmatprep.subr.bf16.mxu0 0
    %1316 = vmatpush1.bf16.msra.mxu0 %v1313
    %1317 = vmatprep.subr.bf16.mxu0 0
    %1318 = vmatpush1.bf16.msra.mxu0 0
    %1319 = vmatprep.subr.bf16.mxu0 0
    %1320 = vmatpush1.bf16.msra.mxu0 0
    %1321 = vmatprep.subr.bf16.mxu0 0
    %1322 = vmatpush1.bf16.msra.mxu0 0
    %1323 = vmatprep.subr.bf16.mxu0 0
    %1324 = vmatpush1.bf16.msra.mxu0 0
    %1325 = vmatprep.subr.bf16.mxu0 0
    %1326 = vmatpush1.bf16.msra.mxu0 0
    %1327 = vmatprep.subr.bf16.mxu0 0
    %1328 = vmatpush1.bf16.msra.mxu0 0
    %1329 = vmatprep.subr.bf16.mxu0 0
    %1330 = vmatpush1.bf16.msra.mxu0 0
    %1331 = vmatprep.subr.bf16.mxu0 0
    %1332 = vmatpush1.bf16.msra.mxu0 0
    %1333 = vmatprep.subr.bf16.mxu0 0
    %1334 = vmatpush1.bf16.msra.mxu0 0
    %1335 = vmatprep.subr.bf16.mxu0 0
    %1336 = vmatpush1.bf16.msra.mxu0 0
    %1337 = vmatprep.subr.bf16.mxu0 0
    %1338 = vmatpush1.bf16.msra.mxu0 0
    %1339 = vmatprep.subr.bf16.mxu0 0
    %1340 = vmatpush1.bf16.msra.mxu0 0
    %1341 = vmatprep.subr.bf16.mxu0 0
    %1342 = vmatpush1.bf16.msra.mxu0 0
    %1343 = vmatprep.subr.bf16.mxu0 0
    %1344 = vmatpush1.bf16.msra.mxu0 0
    %1345 = vmatprep.subr.bf16.mxu0 0
    %1346 = vmatpush1.bf16.msra.mxu0 0
    %1347 = vmatprep.mubr.bf16.mxu0 0
    %1348 = vmatmul.mubr.bf16.gmra.mrb[0].mxu0 %v1310
    %v1349 = vpop.f32.mrb[0].mxu0
    %v1350 = vadd.f32 0.0, %v1349
    %v1351 = vpop.f32.mrb[0].mxu0
    %v1352 = vpop.f32.mrb[0].mxu0
    %v1353 = vpop.f32.mrb[0].mxu0
    %1354 = vdwg.mxu0
    %1355 = vrot.lane.b32.xlu0 %v1186, 64
    %v1356 = vpop.permute.xlu0 %1355
    %v1358 = vsel %vm409, %v1306, 0
    %v1361 = vsel %vm439, %v1356, 0
    %1363 = vmatprep.subr.bf16.mxu0 0
    %1364 = vmatpush1.bf16.msra.mxu0 %v1361
    %1365 = vmatprep.subr.bf16.mxu0 0
    %1366 = vmatpush1.bf16.msra.mxu0 0
    %1367 = vmatprep.subr.bf16.mxu0 0
    %1368 = vmatpush1.bf16.msra.mxu0 0
    %1369 = vmatprep.subr.bf16.mxu0 0
    %1370 = vmatpush1.bf16.msra.mxu0 0
    %1371 = vmatprep.subr.bf16.mxu0 0
    %1372 = vmatpush1.bf16.msra.mxu0 0
    %1373 = vmatprep.subr.bf16.mxu0 0
    %1374 = vmatpush1.bf16.msra.mxu0 0
    %1375 = vmatprep.subr.bf16.mxu0 0
    %1376 = vmatpush1.bf16.msra.mxu0 0
    %1377 = vmatprep.subr.bf16.mxu0 0
    %1378 = vmatpush1.bf16.msra.mxu0 0
    %1379 = vmatprep.subr.bf16.mxu0 0
    %1380 = vmatpush1.bf16.msra.mxu0 0
    %1381 = vmatprep.subr.bf16.mxu0 0
    %1382 = vmatpush1.bf16.msra.mxu0 0
    %1383 = vmatprep.subr.bf16.mxu0 0
    %1384 = vmatpush1.bf16.msra.mxu0 0
    %1385 = vmatprep.subr.bf16.mxu0 0
    %1386 = vmatpush1.bf16.msra.mxu0 0
    %1387 = vmatprep.subr.bf16.mxu0 0
    %1388 = vmatpush1.bf16.msra.mxu0 0
    %1389 = vmatprep.subr.bf16.mxu0 0
    %1390 = vmatpush1.bf16.msra.mxu0 0
    %1391 = vmatprep.subr.bf16.mxu0 0
    %1392 = vmatpush1.bf16.msra.mxu0 0
    %1393 = vmatprep.subr.bf16.mxu0 0
    %1394 = vmatpush1.bf16.msra.mxu0 0
    %1395 = vmatprep.mubr.bf16.mxu0 0
    %1396 = vmatmul.mubr.bf16.gmra.mrb[0].mxu0 %v1358
    %v1397 = vpop.f32.mrb[0].mxu0
    %v1398 = vadd.f32 0.0, %v1397
    %v1399 = vpop.f32.mrb[0].mxu0
    %v1400 = vpop.f32.mrb[0].mxu0
    %v1401 = vpop.f32.mrb[0].mxu0
    %1402 = vdwg.mxu0
    %v1403 = vld [vmem:[#allocation5 + $0x60] sm:$0xf]
    %v1404 = vld [vmem:[#allocation5 + $0x64] sm:$0xf]
    %v1405 = vpack.c.bf16 %v1398, %v1350
    %1406 = vrot.lane.b32.xlu0 %v1185, 112
    %v1407 = vpop.permute.xlu0 %1406
    %1408 = vrot.lane.b32.xlu0 %v1185, 80
    %v1409 = vpop.permute.xlu0 %1408
    %v1411 = vsel %vm314, %v1407, 0
    %v1414 = vsel %vm314, %v1409, 0
    %1416 = vmatprep.subr.bf16.mxu0 0
    %1417 = vmatpush1.bf16.xpose.msra.mxu0 %v1414
    %1418 = vmatprep.subr.bf16.mxu0 0
    %1419 = vmatpush1.bf16.xpose.msra.mxu0 0
    %1420 = vmatprep.subr.bf16.mxu0 0
    %1421 = vmatpush1.bf16.xpose.msra.mxu0 0
    %1422 = vmatprep.subr.bf16.mxu0 0
    %1423 = vmatpush1.bf16.xpose.msra.mxu0 0
    %1424 = vmatprep.subr.bf16.mxu0 0
    %1425 = vmatpush1.bf16.xpose.msra.mxu0 0
    %1426 = vmatprep.subr.bf16.mxu0 0
    %1427 = vmatpush1.bf16.xpose.msra.mxu0 0
    %1428 = vmatprep.subr.bf16.mxu0 0
    %1429 = vmatpush1.bf16.xpose.msra.mxu0 0
    %1430 = vmatprep.subr.bf16.mxu0 0
    %1431 = vmatpush1.bf16.xpose.msra.mxu0 0
    %1432 = vmatprep.subr.bf16.mxu0 0
    %1433 = vmatpush1.bf16.xpose.msra.mxu0 0
    %1434 = vmatprep.subr.bf16.mxu0 0
    %1435 = vmatpush1.bf16.xpose.msra.mxu0 0
    %1436 = vmatprep.subr.bf16.mxu0 0
    %1437 = vmatpush1.bf16.xpose.msra.mxu0 0
    %1438 = vmatprep.subr.bf16.mxu0 0
    %1439 = vmatpush1.bf16.xpose.msra.mxu0 0
    %1440 = vmatprep.subr.bf16.mxu0 0
    %1441 = vmatpush1.bf16.xpose.msra.mxu0 0
    %1442 = vmatprep.subr.bf16.mxu0 0
    %1443 = vmatpush1.bf16.xpose.msra.mxu0 0
    %1444 = vmatprep.subr.bf16.mxu0 0
    %1445 = vmatpush1.bf16.xpose.msra.mxu0 0
    %1446 = vmatprep.subr.bf16.mxu0 0
    %1447 = vmatpush1.bf16.xpose.msra.mxu0 0
    %1448 = vmatprep.mubr.bf16.mxu0 0
    %1449 = vmatmul.mubr.bf16.gmra.mrb[0].mxu0 %v1411
    %v1450 = vpop.f32.mrb[0].mxu0
    %v1451 = vadd.f32 %v233, %v1450
    %v1452 = vpop.f32.mrb[0].mxu0
    %v1453 = vpop.f32.mrb[0].mxu0
    %v1454 = vpop.f32.mrb[0].mxu0
    %1455 = vdwg.mxu0
    %1456 = vrot.lane.b32.xlu0 %v1186, 112
    %v1457 = vpop.permute.xlu0 %1456
    %1458 = vrot.lane.b32.xlu0 %v1186, 80
    %v1459 = vpop.permute.xlu0 %1458
    %v1461 = vsel %vm314, %v1457, 0
    %v1464 = vsel %vm314, %v1459, 0
    %1466 = vmatprep.subr.bf16.mxu0 0
    %1467 = vmatpush1.bf16.xpose.msra.mxu0 %v1464
    %1468 = vmatprep.subr.bf16.mxu0 0
    %1469 = vmatpush1.bf16.xpose.msra.mxu0 0
    %1470 = vmatprep.subr.bf16.mxu0 0
    %1471 = vmatpush1.bf16.xpose.msra.mxu0 0
    %1472 = vmatprep.subr.bf16.mxu0 0
    %1473 = vmatpush1.bf16.xpose.msra.mxu0 0
    %1474 = vmatprep.subr.bf16.mxu0 0
    %1475 = vmatpush1.bf16.xpose.msra.mxu0 0
    %1476 = vmatprep.subr.bf16.mxu0 0
    %1477 = vmatpush1.bf16.xpose.msra.mxu0 0
    %1478 = vmatprep.subr.bf16.mxu0 0
    %1479 = vmatpush1.bf16.xpose.msra.mxu0 0
    %1480 = vmatprep.subr.bf16.mxu0 0
    %1481 = vmatpush1.bf16.xpose.msra.mxu0 0
    %1482 = vmatprep.subr.bf16.mxu0 0
    %1483 = vmatpush1.bf16.xpose.msra.mxu0 0
    %1484 = vmatprep.subr.bf16.mxu0 0
    %1485 = vmatpush1.bf16.xpose.msra.mxu0 0
    %1486 = vmatprep.subr.bf16.mxu0 0
    %1487 = vmatpush1.bf16.xpose.msra.mxu0 0
    %1488 = vmatprep.subr.bf16.mxu0 0
    %1489 = vmatpush1.bf16.xpose.msra.mxu0 0
    %1490 = vmatprep.subr.bf16.mxu0 0
    %1491 = vmatpush1.bf16.xpose.msra.mxu0 0
    %1492 = vmatprep.subr.bf16.mxu0 0
    %1493 = vmatpush1.bf16.xpose.msra.mxu0 0
    %1494 = vmatprep.subr.bf16.mxu0 0
    %1495 = vmatpush1.bf16.xpose.msra.mxu0 0
    %1496 = vmatprep.subr.bf16.mxu0 0
    %1497 = vmatpush1.bf16.xpose.msra.mxu0 0
    %1498 = vmatprep.mubr.bf16.mxu0 0
    %1499 = vmatmul.mubr.bf16.gmra.mrb[0].mxu0 %v1461
    %v1500 = vpop.f32.mrb[0].mxu0
    %v1501 = vadd.f32 %v237, %v1500
    %v1502 = vpop.f32.mrb[0].mxu0
    %v1503 = vpop.f32.mrb[0].mxu0
    %v1504 = vpop.f32.mrb[0].mxu0
    %1505 = vdwg.mxu0
    %v1506 = vsel %vm409, %v1451, -inf
    %1507 = vmax.xlane.f32.xlu0 %v1506
    %v1508 = vpop.xlane.xlu0 %1507
    %v1509 = vsel %vm409, %v1501, -inf
    %1510 = vmax.xlane.f32.xlu0 %v1509
    %v1511 = vpop.xlane.xlu0 %1510
    %v1512 = vsub.f32 %v1451, %v1508
    %v1513 = vsub.f32 %v1501, %v1511
    %v1514 = vmul.f32 %v1512, 1.442695
    %v1515 = vpow.pop %v1514
    %v1516 = vmul.f32 %v1513, 1.442695
    %v1517 = vpow.pop %v1516
    %v1518 = vsel %vm409, %v1515, 0.0
    %1519 = vadd.xlane.f32.xlu0 %v1518
    %v1520 = vpop.xlane.xlu0 %1519
    %v1521 = vsel %vm409, %v1517, 0.0
    %1522 = vadd.xlane.f32.xlu0 %v1521
    %v1523 = vpop.xlane.xlu0 %1522
    %v1524 = vrcp.pop %v1520
    %v1525 = vrcp.pop %v1523
    %v1526 = vmul.f32 %v1515, %v1524
    %v1527 = vmul.f32 %v1517, %v1525
    %v1528 = vpack.c.bf16 %v1526, %v1526
    %v1529 = vpack.c.bf16 %v1527, %v1527
    %1530 = vrot.lane.b32.xlu0 %v1185, 48
    %v1531 = vpop.permute.xlu0 %1530
    %v1533 = vsel %vm409, %v1528, 0
    %v1536 = vsel %vm439, %v1531, 0
    %1538 = vmatprep.subr.bf16.mxu0 0
    %1539 = vmatpush1.bf16.msra.mxu0 %v1536
    %1540 = vmatprep.subr.bf16.mxu0 0
    %1541 = vmatpush1.bf16.msra.mxu0 0
    %1542 = vmatprep.subr.bf16.mxu0 0
    %1543 = vmatpush1.bf16.msra.mxu0 0
    %1544 = vmatprep.subr.bf16.mxu0 0
    %1545 = vmatpush1.bf16.msra.mxu0 0
    %1546 = vmatprep.subr.bf16.mxu0 0
    %1547 = vmatpush1.bf16.msra.mxu0 0
    %1548 = vmatprep.subr.bf16.mxu0 0
    %1549 = vmatpush1.bf16.msra.mxu0 0
    %1550 = vmatprep.subr.bf16.mxu0 0
    %1551 = vmatpush1.bf16.msra.mxu0 0
    %1552 = vmatprep.subr.bf16.mxu0 0
    %1553 = vmatpush1.bf16.msra.mxu0 0
    %1554 = vmatprep.subr.bf16.mxu0 0
    %1555 = vmatpush1.bf16.msra.mxu0 0
    %1556 = vmatprep.subr.bf16.mxu0 0
    %1557 = vmatpush1.bf16.msra.mxu0 0
    %1558 = vmatprep.subr.bf16.mxu0 0
    %1559 = vmatpush1.bf16.msra.mxu0 0
    %1560 = vmatprep.subr.bf16.mxu0 0
    %1561 = vmatpush1.bf16.msra.mxu0 0
    %1562 = vmatprep.subr.bf16.mxu0 0
    %1563 = vmatpush1.bf16.msra.mxu0 0
    %1564 = vmatprep.subr.bf16.mxu0 0
    %1565 = vmatpush1.bf16.msra.mxu0 0
    %1566 = vmatprep.subr.bf16.mxu0 0
    %1567 = vmatpush1.bf16.msra.mxu0 0
    %1568 = vmatprep.subr.bf16.mxu0 0
    %1569 = vmatpush1.bf16.msra.mxu0 0
    %1570 = vmatprep.mubr.bf16.mxu0 0
    %1571 = vmatmul.mubr.bf16.gmra.mrb[0].mxu0 %v1533
    %v1572 = vpop.f32.mrb[0].mxu0
    %v1573 = vadd.f32 0.0, %v1572
    %v1574 = vpop.f32.mrb[0].mxu0
    %v1575 = vpop.f32.mrb[0].mxu0
    %v1576 = vpop.f32.mrb[0].mxu0
    %1577 = vdwg.mxu0
    %1578 = vrot.lane.b32.xlu0 %v1186, 48
    %v1579 = vpop.permute.xlu0 %1578
    %v1581 = vsel %vm409, %v1529, 0
    %v1584 = vsel %vm439, %v1579, 0
    %1586 = vmatprep.subr.bf16.mxu0 0
    %1587 = vmatpush1.bf16.msra.mxu0 %v1584
    %1588 = vmatprep.subr.bf16.mxu0 0
    %1589 = vmatpush1.bf16.msra.mxu0 0
    %1590 = vmatprep.subr.bf16.mxu0 0
    %1591 = vmatpush1.bf16.msra.mxu0 0
    %1592 = vmatprep.subr.bf16.mxu0 0
    %1593 = vmatpush1.bf16.msra.mxu0 0
    %1594 = vmatprep.subr.bf16.mxu0 0
    %1595 = vmatpush1.bf16.msra.mxu0 0
    %1596 = vmatprep.subr.bf16.mxu0 0
    %1597 = vmatpush1.bf16.msra.mxu0 0
    %1598 = vmatprep.subr.bf16.mxu0 0
    %1599 = vmatpush1.bf16.msra.mxu0 0
    %1600 = vmatprep.subr.bf16.mxu0 0
    %1601 = vmatpush1.bf16.msra.mxu0 0
    %1602 = vmatprep.subr.bf16.mxu0 0
    %1603 = vmatpush1.bf16.msra.mxu0 0
    %1604 = vmatprep.subr.bf16.mxu0 0
    %1605 = vmatpush1.bf16.msra.mxu0 0
    %1606 = vmatprep.subr.bf16.mxu0 0
    %1607 = vmatpush1.bf16.msra.mxu0 0
    %1608 = vmatprep.subr.bf16.mxu0 0
    %1609 = vmatpush1.bf16.msra.mxu0 0
    %1610 = vmatprep.subr.bf16.mxu0 0
    %1611 = vmatpush1.bf16.msra.mxu0 0
    %1612 = vmatprep.subr.bf16.mxu0 0
    %1613 = vmatpush1.bf16.msra.mxu0 0
    %1614 = vmatprep.subr.bf16.mxu0 0
    %1615 = vmatpush1.bf16.msra.mxu0 0
    %1616 = vmatprep.subr.bf16.mxu0 0
    %1617 = vmatpush1.bf16.msra.mxu0 0
    %1618 = vmatprep.mubr.bf16.mxu0 0
    %1619 = vmatmul.mubr.bf16.gmra.mrb[0].mxu0 %v1581
    %v1620 = vpop.f32.mrb[0].mxu0
    %v1621 = vadd.f32 0.0, %v1620
    %v1622 = vpop.f32.mrb[0].mxu0
    %v1623 = vpop.f32.mrb[0].mxu0
    %v1624 = vpop.f32.mrb[0].mxu0
    %1625 = vdwg.mxu0
    %v1626 = vld [vmem:[#allocation5 + $0x68] sm:$0xf]
    %v1627 = vld [vmem:[#allocation5 + $0x6c] sm:$0xf]
    %v1628 = vpack.c.bf16 %v1621, %v1573
    %v1631 = vunpack.c.l.b16 %v1626
    %v1632 = vunpack.c.l.b16 %v1627
    %v1633 = vpack.c.b16 %v1632, %v1631
    %v1636 = vsel %vm314, %v1628, 0
    %1638 = vmatprep.subr.bf16.mxu0 0
    %1639 = vmatpush1.bf16.msra.mxu0 %v1633
    %1640 = vmatprep.subr.bf16.mxu0 0
    %1641 = vmatpush1.bf16.msra.mxu0 0
    %1642 = vmatprep.subr.bf16.mxu0 0
    %1643 = vmatpush1.bf16.msra.mxu0 0
    %1644 = vmatprep.subr.bf16.mxu0 0
    %1645 = vmatpush1.bf16.msra.mxu0 0
    %1646 = vmatprep.subr.bf16.mxu0 0
    %1647 = vmatpush1.bf16.msra.mxu0 0
    %1648 = vmatprep.subr.bf16.mxu0 0
    %1649 = vmatpush1.bf16.msra.mxu0 0
    %1650 = vmatprep.subr.bf16.mxu0 0
    %1651 = vmatpush1.bf16.msra.mxu0 0
    %1652 = vmatprep.subr.bf16.mxu0 0
    %1653 = vmatpush1.bf16.msra.mxu0 0
    %1654 = vmatprep.subr.bf16.mxu0 0
    %1655 = vmatpush1.bf16.msra.mxu0 0
    %1656 = vmatprep.subr.bf16.mxu0 0
    %1657 = vmatpush1.bf16.msra.mxu0 0
    %1658 = vmatprep.subr.bf16.mxu0 0
    %1659 = vmatpush1.bf16.msra.mxu0 0
    %1660 = vmatprep.subr.bf16.mxu0 0
    %1661 = vmatpush1.bf16.msra.mxu0 0
    %1662 = vmatprep.subr.bf16.mxu0 0
    %1663 = vmatpush1.bf16.msra.mxu0 0
    %1664 = vmatprep.subr.bf16.mxu0 0
    %1665 = vmatpush1.bf16.msra.mxu0 0
    %1666 = vmatprep.subr.bf16.mxu0 0
    %1667 = vmatpush1.bf16.msra.mxu0 0
    %1668 = vmatprep.subr.bf16.mxu0 0
    %1669 = vmatpush1.bf16.msra.mxu0 0
    %1670 = vmatprep.mubr.bf16.mxu0 0
    %1671 = vmatmul.mubr.bf16.gmra.mrb[0].mxu0 %v1636
    %v1672 = vpop.f32.mrb[0].mxu0
    %v1673 = vadd.f32 0.0, %v1672
    %v1674 = vpop.f32.mrb[0].mxu0
    %v1675 = vpop.f32.mrb[0].mxu0
    %v1676 = vadd.f32 0.0, %v1675
    %v1677 = vpop.f32.mrb[0].mxu0
    %1678 = vdwg.mxu0
    %v1681 = vunpack.c.l.b16 %v1403
    %v1682 = vunpack.c.l.b16 %v1404
    %v1683 = vpack.c.b16 %v1682, %v1681
    %v1686 = vsel %vm314, %v1405, 0
    %1688 = vmatprep.subr.bf16.mxu0 0
    %1689 = vmatpush1.bf16.msra.mxu0 %v1683
    %1690 = vmatprep.subr.bf16.mxu0 0
    %1691 = vmatpush1.bf16.msra.mxu0 0
    %1692 = vmatprep.subr.bf16.mxu0 0
    %1693 = vmatpush1.bf16.msra.mxu0 0
    %1694 = vmatprep.subr.bf16.mxu0 0
    %1695 = vmatpush1.bf16.msra.mxu0 0
    %1696 = vmatprep.subr.bf16.mxu0 0
    %1697 = vmatpush1.bf16.msra.mxu0 0
    %1698 = vmatprep.subr.bf16.mxu0 0
    %1699 = vmatpush1.bf16.msra.mxu0 0
    %1700 = vmatprep.subr.bf16.mxu0 0
    %1701 = vmatpush1.bf16.msra.mxu0 0
    %1702 = vmatprep.subr.bf16.mxu0 0
    %1703 = vmatpush1.bf16.msra.mxu0 0
    %1704 = vmatprep.subr.bf16.mxu0 0
    %1705 = vmatpush1.bf16.msra.mxu0 0
    %1706 = vmatprep.subr.bf16.mxu0 0
    %1707 = vmatpush1.bf16.msra.mxu0 0
    %1708 = vmatprep.subr.bf16.mxu0 0
    %1709 = vmatpush1.bf16.msra.mxu0 0
    %1710 = vmatprep.subr.bf16.mxu0 0
    %1711 = vmatpush1.bf16.msra.mxu0 0
    %1712 = vmatprep.subr.bf16.mxu0 0
    %1713 = vmatpush1.bf16.msra.mxu0 0
    %1714 = vmatprep.subr.bf16.mxu0 0
    %1715 = vmatpush1.bf16.msra.mxu0 0
    %1716 = vmatprep.subr.bf16.mxu0 0
    %1717 = vmatpush1.bf16.msra.mxu0 0
    %1718 = vmatprep.subr.bf16.mxu0 0
    %1719 = vmatpush1.bf16.msra.mxu0 0
    %1720 = vmatprep.mubr.bf16.mxu0 0
    %1721 = vmatmul.mubr.bf16.gmra.mrb[0].mxu0 %v1686
    %v1722 = vpop.f32.mrb[0].mxu0
    %v1723 = vadd.f32 %v1673, %v1722
    %v1724 = vpop.f32.mrb[0].mxu0
    %v1725 = vpop.f32.mrb[0].mxu0
    %v1726 = vadd.f32 %v1676, %v1725
    %v1727 = vpop.f32.mrb[0].mxu0
    %1728 = vdwg.mxu0
    %v1729 = vadd.f32 %v1113, %v1723
    %v1730 = vadd.f32 %v1114, %v1726
    %v1731 = vld [vmem:[#allocation2 + $0x55] sm:$0x1]
    %v1732 = vlaneseq
    %v1733 = vshrl.u32 %v1732, 7
    %v1734 = vsub.s32 0, %v1733
    %v1735 = vrot.slane %v1731, %v1734
    %v1736 = vadd.f32 %v1729, %v1735
    %v1737 = vadd.f32 %v1730, %v1735
    %v1738 = vld [vmem:[#allocation2 + $0x56] sm:$0x1]
    %v1739 = vld [vmem:[#allocation2 + $0x57] sm:$0x1]
    %v1740 = vsel %vm163, %v1736, 0.0
    %1741 = vadd.xlane.f32.xlu0 %v1740
    %v1742 = vpop.xlane.xlu0 %1741
    %v1743 = vsel %vm163, %v1737, 0.0
    %1744 = vadd.xlane.f32.xlu0 %v1743
    %v1745 = vpop.xlane.xlu0 %1744
    %v1746 = vmul.f32 %v1742, %v170
    %v1747 = vmul.f32 %v1745, %v170
    %v1748 = vsub.f32 %v1736, %v1746
    %v1749 = vsub.f32 %v1737, %v1747
    %v1750 = vmul.f32 %v1748, %v1748
    %v1751 = vmul.f32 %v1749, %v1749
    %v1752 = vsel %vm163, %v1750, 0.0
    %1753 = vadd.xlane.f32.xlu0 %v1752
    %v1754 = vpop.xlane.xlu0 %1753
    %v1755 = vsel %vm163, %v1751, 0.0
    %1756 = vadd.xlane.f32.xlu0 %v1755
    %v1757 = vpop.xlane.xlu0 %1756
    %v1758 = vmul.f32 %v1754, %v170
    %v1759 = vmul.f32 %v1757, %v170
    %v1760 = vadd.f32 %v1758, 1e-12
    %v1761 = vadd.f32 %v1759, 1e-12
    %v1762 = vrsqrt.pop %v1760
    %v1763 = vrsqrt.pop %v1761
    %v1764 = vmul.f32 %v1748, %v1762
    %v1765 = vmul.f32 %v1749, %v1763
    %v1766 = vlaneseq
    %v1767 = vshrl.u32 %v1766, 7
    %v1768 = vsub.s32 0, %v1767
    %v1769 = vrot.slane %v1738, %v1768
    %v1770 = vmul.f32 %v1764, %v1769
    %v1771 = vmul.f32 %v1765, %v1769
    %v1772 = vlaneseq
    %v1773 = vshrl.u32 %v1772, 7
    %v1774 = vsub.s32 0, %v1773
    %v1775 = vrot.slane %v1739, %v1774
    %v1776 = vadd.f32 %v1770, %v1775
    %v1777 = vadd.f32 %v1771, %v1775
    %v1778 = vld [vmem:[#allocation5 + $0x70] sm:$0xf]
    %v1779 = vld [vmem:[#allocation5 + $0x74] sm:$0xf]
    %v1780 = vld [vmem:[#allocation5 + $0x78] sm:$0xf]
    %v1781 = vld [vmem:[#allocation5 + $0x7c] sm:$0xf]
    %v1782 = vpack.c.bf16 %v1777, %v1776
    %v1783 = vld [vmem:[#allocation2 + $0x58] sm:$0x1]
    %v1784 = vlaneseq
    %v1785 = vshrl.u32 %v1784, 7
    %v1786 = vsub.s32 0, %v1785
    %v1787 = vrot.slane %v1783, %v1786
    %v1792 = vunpack.c.l.b16 %v1778
    %v1793 = vunpack.c.l.b16 %v1779
    %v1794 = vunpack.c.l.b16 %v1780
    %v1795 = vunpack.c.l.b16 %v1781
    %v1796 = vpack.c.b16 %v1793, %v1792
    %v1797 = vpack.c.b16 %v1795, %v1794
    %v1801 = vsel %vm163, %v1782, 0
    %1803 = vmatprep.subr.bf16.mxu0 0
    %1804 = vmatpush1.bf16.msra.mxu0 %v1796
    %1805 = vmatprep.subr.bf16.mxu0 0
    %1806 = vmatpush1.bf16.msra.mxu0 %v1797
    %1807 = vmatprep.subr.bf16.mxu0 0
    %1808 = vmatpush1.bf16.msra.mxu0 0
    %1809 = vmatprep.subr.bf16.mxu0 0
    %1810 = vmatpush1.bf16.msra.mxu0 0
    %1811 = vmatprep.subr.bf16.mxu0 0
    %1812 = vmatpush1.bf16.msra.mxu0 0
    %1813 = vmatprep.subr.bf16.mxu0 0
    %1814 = vmatpush1.bf16.msra.mxu0 0
    %1815 = vmatprep.subr.bf16.mxu0 0
    %1816 = vmatpush1.bf16.msra.mxu0 0
    %1817 = vmatprep.subr.bf16.mxu0 0
    %1818 = vmatpush1.bf16.msra.mxu0 0
    %1819 = vmatprep.subr.bf16.mxu0 0
    %1820 = vmatpush1.bf16.msra.mxu0 0
    %1821 = vmatprep.subr.bf16.mxu0 0
    %1822 = vmatpush1.bf16.msra.mxu0 0
    %1823 = vmatprep.subr.bf16.mxu0 0
    %1824 = vmatpush1.bf16.msra.mxu0 0
    %1825 = vmatprep.subr.bf16.mxu0 0
    %1826 = vmatpush1.bf16.msra.mxu0 0
    %1827 = vmatprep.subr.bf16.mxu0 0
    %1828 = vmatpush1.bf16.msra.mxu0 0
    %1829 = vmatprep.subr.bf16.mxu0 0
    %1830 = vmatpush1.bf16.msra.mxu0 0
    %1831 = vmatprep.subr.bf16.mxu0 0
    %1832 = vmatpush1.bf16.msra.mxu0 0
    %1833 = vmatprep.subr.bf16.mxu0 0
    %1834 = vmatpush1.bf16.msra.mxu0 0
    %1835 = vmatprep.mubr.bf16.mxu0 0
    %1836 = vmatmul.mubr.bf16.gmra.mrb[0].mxu0 %v1801
    %v1837 = vpop.f32.mrb[0].mxu0
    %v1838 = vadd.f32 %v1787, %v1837
    %v1839 = vpop.f32.mrb[0].mxu0
    %v1840 = vpop.f32.mrb[0].mxu0
    %v1841 = vadd.f32 %v1787, %v1840
    %v1842 = vpop.f32.mrb[0].mxu0
    %1843 = vdwg.mxu0
    %v1844 = vmul.f32 %v1838, 0.5
    %v1845 = vmul.f32 %v1841, 0.5
    %v1846 = vmul.f32 %v1838, 0.044715
    %v1847 = vmul.f32 %v1841, 0.044715
    %v1848 = vmul.f32 %v1846, %v1838
    %v1849 = vmul.f32 %v1847, %v1841
    %v1850 = vmul.f32 %v1848, %v1838
    %v1851 = vmul.f32 %v1849, %v1841
    %v1852 = vadd.f32 %v1838, %v1850
    %v1853 = vadd.f32 %v1841, %v1851
    %v1854 = vmul.f32 %v1852, 0.7978846
    %v1855 = vmul.f32 %v1853, 0.7978846
    %v1856 = vtanh.pop %v1854
    %v1857 = vtanh.pop %v1855
    %v1858 = vadd.f32 %v1856, 1.0
    %v1859 = vadd.f32 %v1857, 1.0
    %v1860 = vmul.f32 %v1844, %v1858
    %v1861 = vmul.f32 %v1845, %v1859
    %v1862 = vld [vmem:[#allocation5 + $0x80] sm:$0xf]
    %v1863 = vld [vmem:[#allocation5 + $0x84] sm:$0xf]
    %v1864 = vld [vmem:[#allocation5 + $0x88] sm:$0xf]
    %v1865 = vld [vmem:[#allocation5 + $0x8c] sm:$0xf]
    %v1866 = vld [vmem:[#allocation5 + $0x90] sm:$0xf]
    %v1867 = vld [vmem:[#allocation5 + $0x94] sm:$0xf]
    %v1868 = vld [vmem:[#allocation5 + $0x98] sm:$0xf]
    %v1869 = vld [vmem:[#allocation5 + $0x9c] sm:$0xf]
    %v1870 = vpack.c.bf16 %v1861, %v1860
    %v1871 = vld [vmem:[#allocation2 + $0x59] sm:$0x1]
    %v1872 = vlaneseq
    %v1873 = vshrl.u32 %v1872, 7
    %v1874 = vsub.s32 0, %v1873
    %v1875 = vrot.slane %v1871, %v1874
    %v1884 = vunpack.c.l.b16 %v1862
    %v1885 = vunpack.c.l.b16 %v1863
    %v1886 = vunpack.c.l.b16 %v1864
    %v1887 = vunpack.c.l.b16 %v1865
    %v1888 = vunpack.c.l.b16 %v1866
    %v1889 = vunpack.c.l.b16 %v1867
    %v1890 = vunpack.c.l.b16 %v1868
    %v1891 = vunpack.c.l.b16 %v1869
    %v1892 = vpack.c.b16 %v1885, %v1884
    %v1893 = vpack.c.b16 %v1887, %v1886
    %v1894 = vpack.c.b16 %v1889, %v1888
    %v1895 = vpack.c.b16 %v1891, %v1890
    %v1901 = vsel %vm1028, %v1870, 0
    %1903 = vmatprep.subr.bf16.mxu0 0
    %1904 = vmatpush1.bf16.msra.mxu0 %v1892
    %1905 = vmatprep.subr.bf16.mxu0 0
    %1906 = vmatpush1.bf16.msra.mxu0 %v1893
    %1907 = vmatprep.subr.bf16.mxu0 0
    %1908 = vmatpush1.bf16.msra.mxu0 %v1894
    %1909 = vmatprep.subr.bf16.mxu0 0
    %1910 = vmatpush1.bf16.msra.mxu0 %v1895
    %1911 = vmatprep.subr.bf16.mxu0 0
    %1912 = vmatpush1.bf16.msra.mxu0 0
    %1913 = vmatprep.subr.bf16.mxu0 0
    %1914 = vmatpush1.bf16.msra.mxu0 0
    %1915 = vmatprep.subr.bf16.mxu0 0
    %1916 = vmatpush1.bf16.msra.mxu0 0
    %1917 = vmatprep.subr.bf16.mxu0 0
    %1918 = vmatpush1.bf16.msra.mxu0 0
    %1919 = vmatprep.subr.bf16.mxu0 0
    %1920 = vmatpush1.bf16.msra.mxu0 0
    %1921 = vmatprep.subr.bf16.mxu0 0
    %1922 = vmatpush1.bf16.msra.mxu0 0
    %1923 = vmatprep.subr.bf16.mxu0 0
    %1924 = vmatpush1.bf16.msra.mxu0 0
    %1925 = vmatprep.subr.bf16.mxu0 0
    %1926 = vmatpush1.bf16.msra.mxu0 0
    %1927 = vmatprep.subr.bf16.mxu0 0
    %1928 = vmatpush1.bf16.msra.mxu0 0
    %1929 = vmatprep.subr.bf16.mxu0 0
    %1930 = vmatpush1.bf16.msra.mxu0 0
    %1931 = vmatprep.subr.bf16.mxu0 0
    %1932 = vmatpush1.bf16.msra.mxu0 0
    %1933 = vmatprep.subr.bf16.mxu0 0
    %1934 = vmatpush1.bf16.msra.mxu0 0
    %1935 = vmatprep.mubr.bf16.mxu0 0
    %1936 = vmatmul.mubr.bf16.gmra.mrb[0].mxu0 %v1901
    %v1937 = vpop.f32.mrb[0].mxu0
    %v1938 = vadd.f32 %v1875, %v1937
    %v1939 = vpop.f32.mrb[0].mxu0
    %v1940 = vpop.f32.mrb[0].mxu0
    %v1941 = vadd.f32 %v1875, %v1940
    %v1942 = vpop.f32.mrb[0].mxu0
    %1943 = vdwg.mxu0
    %v1944 = vadd.f32 %v1776, %v1938
    %v1945 = vadd.f32 %v1777, %v1941
    %v1946 = vld [vmem:[#allocation2 + $0x5a] sm:$0x1]
    %v1947 = vld [vmem:[#allocation2 + $0x5b] sm:$0x1]
    %v1948 = vsel %vm163, %v1944, 0.0
    %1949 = vadd.xlane.f32.xlu0 %v1948
    %v1950 = vpop.xlane.xlu0 %1949
    %v1951 = vsel %vm163, %v1945, 0.0
    %1952 = vadd.xlane.f32.xlu0 %v1951
    %v1953 = vpop.xlane.xlu0 %1952
    %v1954 = vmul.f32 %v1950, %v170
    %v1955 = vmul.f32 %v1953, %v170
    %v1956 = vsub.f32 %v1944, %v1954
    %v1957 = vsub.f32 %v1945, %v1955
    %v1958 = vmul.f32 %v1956, %v1956
    %v1959 = vmul.f32 %v1957, %v1957
    %v1960 = vsel %vm163, %v1958, 0.0
    %1961 = vadd.xlane.f32.xlu0 %v1960
    %v1962 = vpop.xlane.xlu0 %1961
    %v1963 = vsel %vm163, %v1959, 0.0
    %1964 = vadd.xlane.f32.xlu0 %v1963
    %v1965 = vpop.xlane.xlu0 %1964
    %v1966 = vmul.f32 %v1962, %v170
    %v1967 = vmul.f32 %v1965, %v170
    %v1968 = vadd.f32 %v1966, 1e-12
    %v1969 = vadd.f32 %v1967, 1e-12
    %v1970 = vrsqrt.pop %v1968
    %v1971 = vrsqrt.pop %v1969
    %v1972 = vmul.f32 %v1956, %v1970
    %v1973 = vmul.f32 %v1957, %v1971
    %v1974 = vlaneseq
    %v1975 = vshrl.u32 %v1974, 7
    %v1976 = vsub.s32 0, %v1975
    %v1977 = vrot.slane %v1946, %v1976
    %v1978 = vmul.f32 %v1972, %v1977
    %v1979 = vmul.f32 %v1973, %v1977
    %v1980 = vlaneseq
    %v1981 = vshrl.u32 %v1980, 7
    %v1982 = vsub.s32 0, %v1981
    %v1983 = vrot.slane %v1947, %v1982
    %v1984 = vadd.f32 %v1978, %v1983
    %v1985 = vadd.f32 %v1979, %v1983
    %v1986 = vld [vmem:[#allocation5 + $0xa0] sm:$0xf]
    %v1987 = vld [vmem:[#allocation5 + $0xa4] sm:$0xf]
    %v1988 = vld [vmem:[#allocation5 + $0xa8] sm:$0xf]
    %v1989 = vld [vmem:[#allocation5 + $0xac] sm:$0xf]
    %v1990 = vpack.c.bf16 %v1984, %v1984
    %v1991 = vpack.c.bf16 %v1985, %v1985
    %v1992 = vld [vmem:[#allocation2 + $0x5c] sm:$0x1]
    %v1993 = vlaneseq
    %v1994 = vshrl.u32 %v1993, 7
    %v1995 = vsub.s32 0, %v1994
    %v1996 = vrot.slane %v1992, %v1995
    %v1999 = vunpack.c.l.b16 %v1990
    %v2000 = vunpack.c.l.b16 %v1991
    %v2001 = vrot.slane %v2000, 7
    %vm2002 = vcmask 1041409
    %v2003 = vsel %vm2002, %v2001, %v1999
    %v2004 = vpack.c.b16 %v2003, %v2003
    %v2009 = vunpack.c.l.b16 %v1986
    %v2010 = vunpack.c.l.b16 %v1987
    %v2011 = vunpack.c.l.b16 %v1988
    %v2012 = vunpack.c.l.b16 %v1989
    %v2013 = vpack.c.b16 %v2010, %v2009
    %v2014 = vpack.c.b16 %v2012, %v2011
    %v2018 = vsel %vm163, %v2004, 0
    %2020 = vmatprep.subr.bf16.mxu0 0
    %2021 = vmatpush1.bf16.msra.mxu0 %v2013
    %2022 = vmatprep.subr.bf16.mxu0 0
    %2023 = vmatpush1.bf16.msra.mxu0 %v2014
    %2024 = vmatprep.subr.bf16.mxu0 0
    %2025 = vmatpush1.bf16.msra.mxu0 0
    %2026 = vmatprep.subr.bf16.mxu0 0
    %2027 = vmatpush1.bf16.msra.mxu0 0
    %2028 = vmatprep.subr.bf16.mxu0 0
    %2029 = vmatpush1.bf16.msra.mxu0 0
    %2030 = vmatprep.subr.bf16.mxu0 0
    %2031 = vmatpush1.bf16.msra.mxu0 0
    %2032 = vmatprep.subr.bf16.mxu0 0
    %2033 = vmatpush1.bf16.msra.mxu0 0
    %2034 = vmatprep.subr.bf16.mxu0 0
    %2035 = vmatpush1.bf16.msra.mxu0 0
    %2036 = vmatprep.subr.bf16.mxu0 0
    %2037 = vmatpush1.bf16.msra.mxu0 0
    %2038 = vmatprep.subr.bf16.mxu0 0
    %2039 = vmatpush1.bf16.msra.mxu0 0
    %2040 = vmatprep.subr.bf16.mxu0 0
    %2041 = vmatpush1.bf16.msra.mxu0 0
    %2042 = vmatprep.subr.bf16.mxu0 0
    %2043 = vmatpush1.bf16.msra.mxu0 0
    %2044 = vmatprep.subr.bf16.mxu0 0
    %2045 = vmatpush1.bf16.msra.mxu0 0
    %2046 = vmatprep.subr.bf16.mxu0 0
    %2047 = vmatpush1.bf16.msra.mxu0 0
    %2048 = vmatprep.subr.bf16.mxu0 0
    %2049 = vmatpush1.bf16.msra.mxu0 0
    %2050 = vmatprep.subr.bf16.mxu0 0
    %2051 = vmatpush1.bf16.msra.mxu0 0
    %2052 = vmatprep.mubr.bf16.mxu0 0
    %2053 = vmatmul.mubr.bf16.gmra.mrb[0].mxu0 %v2018
    %v2054 = vpop.f32.mrb[0].mxu0
    %v2055 = vadd.f32 %v1996, %v2054
    %v2056 = vpop.f32.mrb[0].mxu0
    %v2057 = vpop.f32.mrb[0].mxu0
    %v2058 = vpop.f32.mrb[0].mxu0
    %2059 = vdwg.mxu0
    %v2060 = vtanh.pop %v2055
    %v2061 = vld [vmem:[#allocation5 + $0xb0] sm:$0xf]
    %v2062 = vld [vmem:[#allocation5 + $0xb4] sm:$0xf]
    %v2063 = vld [vmem:[#allocation5 + $0xb8] sm:$0xf]
    %v2064 = vld [vmem:[#allocation5 + $0xbc] sm:$0xf]
    %v2065 = vpack.c.bf16 %v2060, %v2060
    %v2066 = vld [vmem:[#allocation2 + $0x5d] sm:$0x1]
    %v2067 = vlaneseq
    %v2068 = vshrl.u32 %v2067, 7
    %v2069 = vsub.s32 0, %v2068
    %v2070 = vrot.slane %v2066, %v2069
    %v2075 = vunpack.c.l.b16 %v2061
    %v2076 = vunpack.c.l.b16 %v2062
    %v2077 = vunpack.c.l.b16 %v2063
    %v2078 = vunpack.c.l.b16 %v2064
    %v2079 = vpack.c.b16 %v2076, %v2075
    %v2080 = vpack.c.b16 %v2078, %v2077
    %v2084 = vsel %vm163, %v2065, 0
    %2086 = vmatprep.subr.bf16.mxu0 0
    %2087 = vmatpush1.bf16.msra.mxu0 %v2079
    %2088 = vmatprep.subr.bf16.mxu0 0
    %2089 = vmatpush1.bf16.msra.mxu0 %v2080
    %2090 = vmatprep.subr.bf16.mxu0 0
    %2091 = vmatpush1.bf16.msra.mxu0 0
    %2092 = vmatprep.subr.bf16.mxu0 0
    %2093 = vmatpush1.bf16.msra.mxu0 0
    %2094 = vmatprep.subr.bf16.mxu0 0
    %2095 = vmatpush1.bf16.msra.mxu0 0
    %2096 = vmatprep.subr.bf16.mxu0 0
    %2097 = vmatpush1.bf16.msra.mxu0 0
    %2098 = vmatprep.subr.bf16.mxu0 0
    %2099 = vmatpush1.bf16.msra.mxu0 0
    %2100 = vmatprep.subr.bf16.mxu0 0
    %2101 = vmatpush1.bf16.msra.mxu0 0
    %2102 = vmatprep.subr.bf16.mxu0 0
    %2103 = vmatpush1.bf16.msra.mxu0 0
    %2104 = vmatprep.subr.bf16.mxu0 0
    %2105 = vmatpush1.bf16.msra.mxu0 0
    %2106 = vmatprep.subr.bf16.mxu0 0
    %2107 = vmatpush1.bf16.msra.mxu0 0
    %2108 = vmatprep.subr.bf16.mxu0 0
    %2109 = vmatpush1.bf16.msra.mxu0 0
    %2110 = vmatprep.subr.bf16.mxu0 0
    %2111 = vmatpush1.bf16.msra.mxu0 0
    %2112 = vmatprep.subr.bf16.mxu0 0
    %2113 = vmatpush1.bf16.msra.mxu0 0
    %2114 = vmatprep.subr.bf16.mxu0 0
    %2115 = vmatpush1.bf16.msra.mxu0 0
    %2116 = vmatprep.subr.bf16.mxu0 0
    %2117 = vmatpush1.bf16.msra.mxu0 0
    %2118 = vmatprep.mubr.bf16.mxu0 0
    %2119 = vmatmul.mubr.bf16.gmra.mrb[0].mxu0 %v2084
    %v2120 = vpop.f32.mrb[0].mxu0
    %v2121 = vadd.f32 %v2070, %v2120
    %v2122 = vpop.f32.mrb[0].mxu0
    %v2123 = vpop.f32.mrb[0].mxu0
    %v2124 = vpop.f32.mrb[0].mxu0
    %2125 = vdwg.mxu0
    %2126 = vst [vmem:[#allocation7] sm:$0x3] %v2121
    // Predicated region
    $region26: #{emotion_classifier_forward.1} parent=1 // pred_check
      _
    $region27: #{emotion_classifier_forward.1} parent=1 // pred_check_branch
      %2128 = sbr.rel (0) target = $region29
    $region28: #{emotion_classifier_forward.1} parent=1 // pred_region
      %s2130 = ssub.s32 32, 32
      %2131 = vsyncadd [#allocation4], %s2130
      %s2133 = sshll.u32 [#allocation7], 4
      %s2134 = int_to_ptr.vmem [resolvable:$true] %s2133
      %2136 = dma.vmem_to_hbm [thread:$0]  %s2134, 32, %s4, [#allocation4]
    $region29: #{emotion_classifier_forward.1} parent=1 // pred_fallthru
      _
    // Predicated region
    $region30: #{emotion_classifier_forward.1} parent=1 // pred_check
      _
    $region31: #{emotion_classifier_forward.1} parent=1 // pred_check_branch
      %2138 = sbr.rel (0) target = $region33
    $region32: #{emotion_classifier_forward.1} parent=1 // pred_region
      %2139 = dma.done [#allocation4], 32
    $region33: #{emotion_classifier_forward.1} parent=1 // pred_fallthru
      _
    %2140 = vsyncpa [#allocation3], 1
    %2141 = vsyncpa [#allocation6], 1
    %2142 = vsyncpa [#allocation4], 1

</llo_original>
